<compile_context>
chip_gen: v7x
topology: tpu7x:2x2x1
jax: 0.10.0
libtpu: 0.0.40
codegen_flags: <defaults>
</compile_context>

<pallas_src>
import functools

import jax
import jax.numpy as jnp
from jax.experimental import pallas as pl
from jax.experimental.pallas import tpu as pltpu


def _graph_adj_kernel(*args, alpha, k, n_valid, nb, use_smask, use_noise):
    it = iter(args)
    e1_ref = next(it)          # (Np, Dp)  emb1[idx], zero padded
    e2_ref = next(it)          # (Np, Dp)  emb2[idx], zero padded
    w1_ref = next(it)          # (Dp, Dp)  lin1.weight.T, zero padded
    b1_ref = next(it)          # (1,  Dp)
    w2_ref = next(it)          # (Dp, Dp)  lin2.weight.T, zero padded
    b2_ref = next(it)          # (1,  Dp)
    smask_ref = next(it) if use_smask else None   # (Nb, Np) row block
    noise_ref = next(it) if use_noise else None   # (Nb, Np) row block
    adj_ref = next(it)         # (Nb, Np)  output row block
    nv1_ref = next(it)         # (Np, Dp)  VMEM scratch (persists over grid)
    nv2_ref = next(it)         # (Np, Dp)  VMEM scratch (persists over grid)

    f32 = jnp.float32
    alpha = f32(alpha)

    # Node vectors for ALL rows/columns, computed once (grid step 0) on the
    # MXU and kept resident in VMEM scratch for the remaining row blocks.
    @pl.when(pl.program_id(0) == 0)
    def _():
        h1 = jnp.dot(e1_ref[...], w1_ref[...], preferred_element_type=f32)
        nv1_ref[...] = jnp.tanh(alpha * (h1 + b1_ref[...]))
        h2 = jnp.dot(e2_ref[...], w2_ref[...], preferred_element_type=f32)
        nv2_ref[...] = jnp.tanh(alpha * (h2 + b2_ref[...]))

    nv1_all = nv1_ref[...]                                   # (Np, Dp)
    nv2_all = nv2_ref[...]                                   # (Np, Dp)

    r0 = pl.multiple_of(pl.program_id(0) * nb, nb)
    nv1_blk = nv1_ref[pl.ds(r0, nb), :]                      # (Nb, Dp)
    nv2_blk = nv2_ref[pl.ds(r0, nb), :]                      # (Nb, Dp)

    # a = nv1 @ nv2.T - nv2 @ nv1.T  (contract feature axis of BOTH operands,
    # so no explicit transpose is materialized).
    dn = (((1,), (1,)), ((), ()))
    a = (jax.lax.dot_general(nv1_blk, nv2_all, dn, preferred_element_type=f32)
         - jax.lax.dot_general(nv2_blk, nv1_all, dn, preferred_element_type=f32))
    if use_smask:
        a = a * smask_ref[...]
    adj = jnp.maximum(jnp.tanh(alpha * a), 0.0)              # relu(tanh(alpha*a))

    # Per-row top-k mask on (adj + noise); padded columns are excluded.
    col = jax.lax.broadcasted_iota(jnp.int32, adj.shape, 1)
    valid = col < n_valid
    neg = f32(-1e30)
    scores = adj + noise_ref[...] if use_noise else adj
    scores = jnp.where(valid, scores, neg)

    # k iterations of row-max + knock-out -> k-th largest value per row.
    work = scores
    kth = jnp.full((adj.shape[0], 1), neg, f32)
    if k <= 32:   # small static k: unroll for scheduler visibility
        for _ in range(k):
            kth = jnp.max(work, axis=1, keepdims=True)
            work = jnp.where(work >= kth, neg, work)
    else:
        def knockout(_, carry):
            w, _ = carry
            m = jnp.max(w, axis=1, keepdims=True)
            return jnp.where(w >= m, neg, w), m
        work, kth = jax.lax.fori_loop(0, k, knockout, (work, kth))

    keep = (scores >= kth) & valid
    adj_ref[...] = jnp.where(keep, adj, 0.0).astype(adj_ref.dtype)


def _round_up(x, m):
    return ((x + m - 1) // m) * m


def _pad2(x, rows, cols):
    return jnp.pad(x, ((0, rows - x.shape[0]), (0, cols - x.shape[1])))


def graph_constructor_forward(idx, emb1_weight, emb2_weight,
                              lin1_weight, lin1_bias, lin2_weight, lin2_bias,
                              *, k, alpha=3.0, noise=None, s_mask=None):
    """Pallas forward of MTGNN graph_constructor (static_feat=None path).

    idx:              (N,) int node indices
    emb{1,2}_weight:  (nnodes, dim) embedding tables
    lin{1,2}_weight:  (dim, dim), lin{1,2}_bias: (dim,)  (PyTorch Linear layout)
    noise:            optional (N, N), plays the role of torch.rand_like(adj)*0.01
    s_mask:           optional (N, N) multiplicative mask on `a`
    returns:          (N, N) sparsified adjacency (top-k kept per row)
    """
    N = int(idx.shape[0])
    dim = int(emb1_weight.shape[1])
    k = int(k)
    assert 1 <= k <= N, "k must be in [1, N]"

    # Embedding lookup (gather) stays in the wrapper.
    e1 = jnp.take(emb1_weight, idx, axis=0).astype(jnp.float32)   # (N, dim)
    e2 = jnp.take(emb2_weight, idx, axis=0).astype(jnp.float32)

    Np = _round_up(N, 128)       # lane-dense (N, N) output, aligned rows
    Dp = _round_up(dim, 128)     # MXU-friendly contraction depth

    e1p = _pad2(e1, Np, Dp)
    e2p = _pad2(e2, Np, Dp)
    w1p = _pad2(jnp.asarray(lin1_weight, jnp.float32).T, Dp, Dp)   # x @ W.T
    w2p = _pad2(jnp.asarray(lin2_weight, jnp.float32).T, Dp, Dp)
    b1p = _pad2(jnp.asarray(lin1_bias, jnp.float32).reshape(1, dim), 1, Dp)
    b2p = _pad2(jnp.asarray(lin2_bias, jnp.float32).reshape(1, dim), 1, Dp)

    use_noise = noise is not None
    use_smask = s_mask is not None

    # Row-block size: largest (8,128)-aligned divisor of Np whose (Nb, Np)
    # f32 block stays <= ~1 MiB, keeping double-buffered blocks + top-k
    # temporaries well inside the scoped-VMEM default on every chip.
    Nb = 128
    for cand in (1024, 512, 256):
        if Np % cand == 0 and cand * Np * 4 <= (1 << 20):
            Nb = cand
            break
    Nb = min(Nb, Np)

    inputs = [e1p, e2p, w1p, b1p, w2p, b2p]
    in_specs = [
        pl.BlockSpec((Np, Dp), lambda i: (0, 0)),   # e1 (all rows)
        pl.BlockSpec((Np, Dp), lambda i: (0, 0)),   # e2 (all rows)
        pl.BlockSpec((Dp, Dp), lambda i: (0, 0)),   # W1^T
        pl.BlockSpec((1, Dp), lambda i: (0, 0)),    # b1
        pl.BlockSpec((Dp, Dp), lambda i: (0, 0)),   # W2^T
        pl.BlockSpec((1, Dp), lambda i: (0, 0)),    # b2
    ]
    if use_smask:
        inputs.append(_pad2(jnp.asarray(s_mask, jnp.float32), Np, Np))
        in_specs.append(pl.BlockSpec((Nb, Np), lambda i: (i, 0)))
    if use_noise:
        inputs.append(_pad2(jnp.asarray(noise, jnp.float32), Np, Np))
        in_specs.append(pl.BlockSpec((Nb, Np), lambda i: (i, 0)))

    kernel = functools.partial(
        _graph_adj_kernel, alpha=float(alpha), k=k, n_valid=N, nb=Nb,
        use_smask=use_smask, use_noise=use_noise)

    adj_padded = pl.pallas_call(
        kernel,
        out_shape=jax.ShapeDtypeStruct((Np, Np), jnp.float32),
        grid_spec=pltpu.PrefetchScalarGridSpec(
            num_scalar_prefetch=0,
            grid=(Np // Nb,),
            in_specs=in_specs,
            out_specs=pl.BlockSpec((Nb, Np), lambda i: (i, 0)),
            scratch_shapes=[pltpu.VMEM((Np, Dp), jnp.float32),
                            pltpu.VMEM((Np, Dp), jnp.float32)],
        ),
        # "arbitrary": the node-vector scratch is initialized only at grid
        # step 0 and reused by every subsequent row block.
        compiler_params=pltpu.CompilerParams(
            dimension_semantics=("arbitrary",)),
    )(*inputs)

    return adj_padded[:N, :N]


def _reference_forward(idx, emb1_weight, emb2_weight,
                       lin1_weight, lin1_bias, lin2_weight, lin2_bias,
                       *, k, alpha=3.0, noise=None, s_mask=None):
    """Pure-jnp replica of the PyTorch forward, for verification."""
    hi = jax.lax.Precision.HIGHEST
    e1 = emb1_weight[idx]
    e2 = emb2_weight[idx]
    nv1 = jnp.tanh(alpha * (jnp.dot(e1, lin1_weight.T, precision=hi) + lin1_bias))
    nv2 = jnp.tanh(alpha * (jnp.dot(e2, lin2_weight.T, precision=hi) + lin2_bias))
    a = (jnp.dot(nv1, nv2.T, precision=hi) - jnp.dot(nv2, nv1.T, precision=hi))
    if s_mask is not None:
        a = a * s_mask
    adj = jax.nn.relu(jnp.tanh(alpha * a))
    scores = adj + noise if noise is not None else adj
    _, t1 = jax.lax.top_k(scores, k)
    rows = jnp.arange(adj.shape[0])[:, None]
    mask = jnp.zeros_like(adj).at[rows, t1].set(1.0)
    return adj * mask


if __name__ == "__main__":
    # Small shapes consistent with the module: 16 nodes, dim=32, top-k=4.
    nnodes, dim, topk, alpha = 16, 32, 4, 3.0

    key = jax.random.PRNGKey(0)
    keys = jax.random.split(key, 8)
    emb1 = jax.random.normal(keys[0], (nnodes, dim), jnp.float32)
    emb2 = jax.random.normal(keys[1], (nnodes, dim), jnp.float32)
    lin1_w = 0.3 * jax.random.normal(keys[2], (dim, dim), jnp.float32)
    lin1_b = 0.1 * jax.random.normal(keys[3], (dim,), jnp.float32)
    lin2_w = 0.3 * jax.random.normal(keys[4], (dim, dim), jnp.float32)
    lin2_b = 0.1 * jax.random.normal(keys[5], (dim,), jnp.float32)
    idx = jnp.arange(nnodes, dtype=jnp.int32)
    # plays the role of torch.rand_like(adj) * 0.01 (random top-k tie breaking)
    noise = 0.01 * jax.random.uniform(keys[6], (nnodes, nnodes), jnp.float32)
    s_mask = (jax.random.uniform(keys[7], (nnodes, nnodes)) > 0.2).astype(jnp.float32)

    # Path 1: no s_mask (the default MTGNN call).
    out = graph_constructor_forward(
        idx, emb1, emb2, lin1_w, lin1_b, lin2_w, lin2_b,
        k=topk, alpha=alpha, noise=noise)
    out = jax.block_until_ready(out)
    ref = _reference_forward(
        idx, emb1, emb2, lin1_w, lin1_b, lin2_w, lin2_b,
        k=topk, alpha=alpha, noise=noise)
    assert out.shape == (nnodes, nnodes)
    assert int(jnp.max(jnp.sum(out > 0, axis=1))) <= topk
    assert jnp.allclose(out, ref, rtol=1e-4, atol=1e-4), "mismatch vs reference"

    # Path 2: with s_mask.
    out_m = graph_constructor_forward(
        idx, emb1, emb2, lin1_w, lin1_b, lin2_w, lin2_b,
        k=topk, alpha=alpha, noise=noise, s_mask=s_mask)
    out_m = jax.block_until_ready(out_m)
    ref_m = _reference_forward(
        idx, emb1, emb2, lin1_w, lin1_b, lin2_w, lin2_b,
        k=topk, alpha=alpha, noise=noise, s_mask=s_mask)
    assert jnp.allclose(out_m, ref_m, rtol=1e-4, atol=1e-4), "mismatch (s_mask)"

    print("KERNEL_OK")
</pallas_src>

<mosaic_0001>
module attributes {stable_mosaic.version = 11 : i64} {
  func.func @_graph_adj_kernel(%arg0: i32, %arg1: memref<128x128xf32, #tpu.memory_space<vmem>>, %arg2: memref<128x128xf32, #tpu.memory_space<vmem>>, %arg3: memref<128x128xf32, #tpu.memory_space<vmem>>, %arg4: memref<1x128xf32, #tpu.memory_space<vmem>>, %arg5: memref<128x128xf32, #tpu.memory_space<vmem>>, %arg6: memref<1x128xf32, #tpu.memory_space<vmem>>, %arg7: memref<128x128xf32, #tpu.memory_space<vmem>>, %arg8: memref<128x128xf32, #tpu.memory_space<vmem>>, %arg9: memref<128x128xf32, #tpu.memory_space<vmem>>, %arg10: memref<128x128xf32, #tpu.memory_space<vmem>>) attributes {dimension_semantics = [#tpu.dimension_semantics<arbitrary>], iteration_bounds = array<i64: 1>, scalar_prefetch = 0 : i64, scratch_operands = 2 : i64, tpu.core_type = #tpu.core_type<tc>, window_params = [{pipeline_mode = #tpu.pipeline_mode<synchronous>, transform_indices = @transform_0, window_bounds = array<i64: 128, 128>}, {pipeline_mode = #tpu.pipeline_mode<synchronous>, transform_indices = @transform_1, window_bounds = array<i64: 128, 128>}, {pipeline_mode = #tpu.pipeline_mode<synchronous>, transform_indices = @transform_2, window_bounds = array<i64: 128, 128>}, {pipeline_mode = #tpu.pipeline_mode<synchronous>, transform_indices = @transform_3, window_bounds = array<i64: 1, 128>}, {pipeline_mode = #tpu.pipeline_mode<synchronous>, transform_indices = @transform_4, window_bounds = array<i64: 128, 128>}, {pipeline_mode = #tpu.pipeline_mode<synchronous>, transform_indices = @transform_5, window_bounds = array<i64: 1, 128>}, {transform_indices = @transform_6, window_bounds = array<i64: 128, 128>}, {transform_indices = @transform_7, window_bounds = array<i64: 128, 128>}]} {
    %c0_i32 = arith.constant 0 : i32
    %0 = arith.cmpi eq, %arg0, %c0_i32 : i32
    %1 = arith.extui %0 : i1 to i32
    %cst = arith.constant 3.000000e+00 : f32
    %c0_i32_0 = arith.constant 0 : i32
    %2 = arith.cmpi ne, %1, %c0_i32_0 : i32
    scf.if %2 {
      %c0_23 = arith.constant 0 : index
      %c0_24 = arith.constant 0 : index
      %52 = vector.load %arg1[%c0_23, %c0_24] : memref<128x128xf32, #tpu.memory_space<vmem>>, vector<128x128xf32>
      %c0_25 = arith.constant 0 : index
      %c0_26 = arith.constant 0 : index
      %53 = vector.load %arg3[%c0_25, %c0_26] : memref<128x128xf32, #tpu.memory_space<vmem>>, vector<128x128xf32>
      %cst_27 = arith.constant dense<0.000000e+00> : vector<128x128xf32>
      %54 = tpu.matmul %52, %53, %cst_27 {dimension_numbers = #tpu.dot_dimension_numbers<[1], [0], [0], [1], [0, 0, 1, 1], [], []>} : vector<128x128xf32>, vector<128x128xf32>, vector<128x128xf32> -> vector<128x128xf32>
      %c0_28 = arith.constant 0 : index
      %c0_29 = arith.constant 0 : index
      %55 = vector.load %arg4[%c0_28, %c0_29] : memref<1x128xf32, #tpu.memory_space<vmem>>, vector<1x128xf32>
      %56 = vector.broadcast %55 : vector<1x128xf32> to vector<128x128xf32>
      %57 = arith.addf %54, %56 : vector<128x128xf32>
      %58 = vector.broadcast %cst : f32 to vector<128x128xf32>
      %59 = arith.mulf %58, %57 : vector<128x128xf32>
      %60 = math.tanh %59 : vector<128x128xf32>
      %c0_30 = arith.constant 0 : index
      %c0_31 = arith.constant 0 : index
      %61 = vector.load %arg9[%c0_30, %c0_31] : memref<128x128xf32, #tpu.memory_space<vmem>>, vector<128x128xf32>
      tpu.vector_store %arg9[%c0_30, %c0_31], %60 {strides = array<i32>} : memref<128x128xf32, #tpu.memory_space<vmem>>, vector<128x128xf32>,
      %c0_32 = arith.constant 0 : index
      %c0_33 = arith.constant 0 : index
      %62 = vector.load %arg2[%c0_32, %c0_33] : memref<128x128xf32, #tpu.memory_space<vmem>>, vector<128x128xf32>
      %c0_34 = arith.constant 0 : index
      %c0_35 = arith.constant 0 : index
      %63 = vector.load %arg5[%c0_34, %c0_35] : memref<128x128xf32, #tpu.memory_space<vmem>>, vector<128x128xf32>
      %cst_36 = arith.constant dense<0.000000e+00> : vector<128x128xf32>
      %64 = tpu.matmul %62, %63, %cst_36 {dimension_numbers = #tpu.dot_dimension_numbers<[1], [0], [0], [1], [0, 0, 1, 1], [], []>} : vector<128x128xf32>, vector<128x128xf32>, vector<128x128xf32> -> vector<128x128xf32>
      %c0_37 = arith.constant 0 : index
      %c0_38 = arith.constant 0 : index
      %65 = vector.load %arg6[%c0_37, %c0_38] : memref<1x128xf32, #tpu.memory_space<vmem>>, vector<1x128xf32>
      %66 = vector.broadcast %65 : vector<1x128xf32> to vector<128x128xf32>
      %67 = arith.addf %64, %66 : vector<128x128xf32>
      %68 = vector.broadcast %cst : f32 to vector<128x128xf32>
      %69 = arith.mulf %68, %67 : vector<128x128xf32>
      %70 = math.tanh %69 : vector<128x128xf32>
      %c0_39 = arith.constant 0 : index
      %c0_40 = arith.constant 0 : index
      %71 = vector.load %arg10[%c0_39, %c0_40] : memref<128x128xf32, #tpu.memory_space<vmem>>, vector<128x128xf32>
      tpu.vector_store %arg10[%c0_39, %c0_40], %70 {strides = array<i32>} : memref<128x128xf32, #tpu.memory_space<vmem>>, vector<128x128xf32>,
    } else {
    }
    %c0 = arith.constant 0 : index
    %c0_1 = arith.constant 0 : index
    %3 = vector.load %arg9[%c0, %c0_1] : memref<128x128xf32, #tpu.memory_space<vmem>>, vector<128x128xf32>
    %c0_2 = arith.constant 0 : index
    %c0_3 = arith.constant 0 : index
    %4 = vector.load %arg10[%c0_2, %c0_3] : memref<128x128xf32, #tpu.memory_space<vmem>>, vector<128x128xf32>
    %c128_i32 = arith.constant 128 : i32
    %5 = arith.muli %arg0, %c128_i32 : i32
    %6 = tpu.assume_multiple %5, 128 : i32
    %7 = arith.index_cast %6 : i32 to index
    %c0_4 = arith.constant 0 : index
    %8 = vector.load %arg9[%7, %c0_4] : memref<128x128xf32, #tpu.memory_space<vmem>>, vector<128x128xf32>
    %9 = arith.index_cast %6 : i32 to index
    %c0_5 = arith.constant 0 : index
    %10 = vector.load %arg10[%9, %c0_5] : memref<128x128xf32, #tpu.memory_space<vmem>>, vector<128x128xf32>
    %cst_6 = arith.constant dense<0.000000e+00> : vector<128x128xf32>
    %11 = tpu.matmul %8, %4, %cst_6 {dimension_numbers = #tpu.dot_dimension_numbers<[1], [1], [0], [0], [0, 0, 1, 0], [], []>} : vector<128x128xf32>, vector<128x128xf32>, vector<128x128xf32> -> vector<128x128xf32>
    %cst_7 = arith.constant dense<0.000000e+00> : vector<128x128xf32>
    %12 = tpu.matmul %10, %3, %cst_7 {dimension_numbers = #tpu.dot_dimension_numbers<[1], [1], [0], [0], [0, 0, 1, 0], [], []>} : vector<128x128xf32>, vector<128x128xf32>, vector<128x128xf32> -> vector<128x128xf32>
    %13 = arith.subf %11, %12 : vector<128x128xf32>
    %cst_8 = arith.constant 3.000000e+00 : f32
    %14 = vector.broadcast %cst_8 : f32 to vector<128x128xf32>
    %15 = arith.mulf %14, %13 : vector<128x128xf32>
    %16 = math.tanh %15 : vector<128x128xf32>
    %cst_9 = arith.constant 0.000000e+00 : f32
    %17 = vector.broadcast %cst_9 : f32 to vector<128x128xf32>
    %18 = arith.maximumf %16, %17 : vector<128x128xf32>
    %19 = tpu.iota {dimensions = array<i32: 1>} : vector<128x128xi32>
    %c16_i32 = arith.constant 16 : i32
    %20 = vector.broadcast %c16_i32 : i32 to vector<128x128xi32>
    %21 = arith.cmpi slt, %19, %20 : vector<128x128xi32>
    %c0_10 = arith.constant 0 : index
    %c0_11 = arith.constant 0 : index
    %22 = vector.load %arg7[%c0_10, %c0_11] : memref<128x128xf32, #tpu.memory_space<vmem>>, vector<128x128xf32>
    %23 = arith.addf %18, %22 : vector<128x128xf32>
    %cst_12 = arith.constant -1.000000e+30 : f32
    %24 = vector.broadcast %cst_12 : f32 to vector<128x128xf32>
    %25 = arith.select %21, %23, %24 : vector<128x128xi1>, vector<128x128xf32>
    %cst_13 = arith.constant dense<0xFF800000> : vector<128xf32>
    %26 = vector.multi_reduction <maximumf>, %25, %cst_13 [1] : vector<128x128xf32> to vector<128xf32>
    %27 = vector.shape_cast %26 : vector<128xf32> to vector<128x1xf32>
    %28 = vector.broadcast %27 : vector<128x1xf32> to vector<128x128xf32>
    %29 = arith.cmpf oge, %25, %28 : vector<128x128xf32>
    %cst_14 = arith.constant -1.000000e+30 : f32
    %30 = vector.broadcast %cst_14 : f32 to vector<128x128xf32>
    %31 = arith.select %29, %30, %25 : vector<128x128xi1>, vector<128x128xf32>
    %cst_15 = arith.constant dense<0xFF800000> : vector<128xf32>
    %32 = vector.multi_reduction <maximumf>, %31, %cst_15 [1] : vector<128x128xf32> to vector<128xf32>
    %33 = vector.shape_cast %32 : vector<128xf32> to vector<128x1xf32>
    %34 = vector.broadcast %33 : vector<128x1xf32> to vector<128x128xf32>
    %35 = arith.cmpf oge, %31, %34 : vector<128x128xf32>
    %cst_16 = arith.constant -1.000000e+30 : f32
    %36 = vector.broadcast %cst_16 : f32 to vector<128x128xf32>
    %37 = arith.select %35, %36, %31 : vector<128x128xi1>, vector<128x128xf32>
    %cst_17 = arith.constant dense<0xFF800000> : vector<128xf32>
    %38 = vector.multi_reduction <maximumf>, %37, %cst_17 [1] : vector<128x128xf32> to vector<128xf32>
    %39 = vector.shape_cast %38 : vector<128xf32> to vector<128x1xf32>
    %40 = vector.broadcast %39 : vector<128x1xf32> to vector<128x128xf32>
    %41 = arith.cmpf oge, %37, %40 : vector<128x128xf32>
    %cst_18 = arith.constant -1.000000e+30 : f32
    %42 = vector.broadcast %cst_18 : f32 to vector<128x128xf32>
    %43 = arith.select %41, %42, %37 : vector<128x128xi1>, vector<128x128xf32>
    %cst_19 = arith.constant dense<0xFF800000> : vector<128xf32>
    %44 = vector.multi_reduction <maximumf>, %43, %cst_19 [1] : vector<128x128xf32> to vector<128xf32>
    %45 = vector.shape_cast %44 : vector<128xf32> to vector<128x1xf32>
    %46 = vector.broadcast %45 : vector<128x1xf32> to vector<128x128xf32>
    %47 = arith.cmpf oge, %25, %46 : vector<128x128xf32>
    %48 = arith.andi %47, %21 : vector<128x128xi1>
    %cst_20 = arith.constant 0.000000e+00 : f32
    %49 = vector.broadcast %cst_20 : f32 to vector<128x128xf32>
    %50 = arith.select %48, %18, %49 : vector<128x128xi1>, vector<128x128xf32>
    %c0_21 = arith.constant 0 : index
    %c0_22 = arith.constant 0 : index
    %51 = vector.load %arg8[%c0_21, %c0_22] : memref<128x128xf32, #tpu.memory_space<vmem>>, vector<128x128xf32>
    tpu.vector_store %arg8[%c0_21, %c0_22], %50 {strides = array<i32>} : memref<128x128xf32, #tpu.memory_space<vmem>>, vector<128x128xf32>,
    return
  }
  func.func @transform_0(%arg0: i32) -> (i32, i32) {
    %c0_i32 = arith.constant 0 : i32
    %c0_i32_0 = arith.constant 0 : i32
    %c0_i32_1 = arith.constant 0 : i32
    return %c0_i32, %c0_i32_0 : i32, i32
  }
  func.func @transform_1(%arg0: i32) -> (i32, i32) {
    %c0_i32 = arith.constant 0 : i32
    %c0_i32_0 = arith.constant 0 : i32
    %c0_i32_1 = arith.constant 0 : i32
    return %c0_i32, %c0_i32_0 : i32, i32
  }
  func.func @transform_2(%arg0: i32) -> (i32, i32) {
    %c0_i32 = arith.constant 0 : i32
    %c0_i32_0 = arith.constant 0 : i32
    %c0_i32_1 = arith.constant 0 : i32
    return %c0_i32, %c0_i32_0 : i32, i32
  }
  func.func @transform_3(%arg0: i32) -> (i32, i32) {
    %c0_i32 = arith.constant 0 : i32
    %c0_i32_0 = arith.constant 0 : i32
    %c0_i32_1 = arith.constant 0 : i32
    return %c0_i32, %c0_i32_0 : i32, i32
  }
  func.func @transform_4(%arg0: i32) -> (i32, i32) {
    %c0_i32 = arith.constant 0 : i32
    %c0_i32_0 = arith.constant 0 : i32
    %c0_i32_1 = arith.constant 0 : i32
    return %c0_i32, %c0_i32_0 : i32, i32
  }
  func.func @transform_5(%arg0: i32) -> (i32, i32) {
    %c0_i32 = arith.constant 0 : i32
    %c0_i32_0 = arith.constant 0 : i32
    %c0_i32_1 = arith.constant 0 : i32
    return %c0_i32, %c0_i32_0 : i32, i32
  }
  func.func @transform_6(%arg0: i32) -> (i32, i32) {
    %c0_i32 = arith.constant 0 : i32
    %c0_i32_0 = arith.constant 0 : i32
    return %arg0, %c0_i32 : i32, i32
  }
  func.func @transform_7(%arg0: i32) -> (i32, i32) {
    %c0_i32 = arith.constant 0 : i32
    %c0_i32_0 = arith.constant 0 : i32
    return %arg0, %c0_i32 : i32, i32
  }
}

</mosaic_0001>

<llo_original>
// kernel: tpu_custom_call.1
$region0: #{tpu_custom_call.1}
  #allocation0 [shape = 'u32[]', space=smem, size = 0x4, offset = 0x4, fixed_abs, tag = 'smem constant byte address 0x4 - core index']
  #allocation1 [shape = 'u32[144,128]{1,0:T(1,128)}', space=vmem, size = 0x12000, scoped, tag = 'internal scratch']
  #allocation2 [shape = 'f32[128,128]{1,0:T(8,128)}', space=vmem, size = 0x10000, scoped, tag = 'scratch operand']
  #allocation3 [shape = 'f32[128,128]{1,0:T(8,128)}', space=vmem, size = 0x10000, scoped, tag = 'scratch operand']
  %s0 = inlined_call_operand.hbm [shape: f32[128,128], index: 0, kind: input, shape index: {}]
  %s1 = inlined_call_operand.hbm [shape: f32[128,128], index: 1, kind: input, shape index: {}]
  %s2 = inlined_call_operand.hbm [shape: f32[128,128], index: 2, kind: input, shape index: {}]
  %s3 = inlined_call_operand.vmem [shape: f32[1,128], index: 3, kind: input, shape index: {}]
  %s4 = inlined_call_operand.hbm [shape: f32[128,128], index: 4, kind: input, shape index: {}]
  %s5 = inlined_call_operand.vmem [shape: f32[1,128], index: 5, kind: input, shape index: {}]
  %s6 = inlined_call_operand.hbm [shape: f32[128,128], index: 6, kind: input, shape index: {}]
  %s7 = inlined_call_operand.hbm [shape: f32[128,128], index: 7, kind: output, shape index: {}]
  %s8 = sld [smem:[#allocation0]]
  $region62: #{tpu_custom_call.1} parent=0
    _
  %s10 = ssub.s32 1, %s8
  %s11 = scalar_select 0, %s10, %s8
  $region1: #{tpu_custom_call.1} parent=0
    #allocation4 [shape = 'u8[65536]{0}', space=vmem, size = 0x10000, scoped, tag = 'input window, operand 0, single buffered']
    #allocation5 [shape = 's32[1]{0}', space=sflag, size = 0x4, scoped, tag = 'scoped memory for tpu_custom_call.1']
    #allocation6 [shape = 's32[1]{0}', space=sflag, size = 0x4, scoped, tag = 'scoped memory for tpu_custom_call.1']
    #allocation7 [shape = 'u8[65536]{0}', space=vmem, size = 0x10000, scoped, tag = 'input window, operand 1, single buffered']
    #allocation8 [shape = 's32[1]{0}', space=sflag, size = 0x4, scoped, tag = 'scoped memory for tpu_custom_call.1']
    #allocation9 [shape = 'u8[65536]{0}', space=vmem, size = 0x10000, scoped, tag = 'input window, operand 2, single buffered']
    #allocation10 [shape = 'u8[65536]{0}', space=vmem, size = 0x10000, scoped, tag = 'input window, operand 4, single buffered']
    #allocation11 [shape = 's32[1]{0}', space=sflag, size = 0x4, scoped, tag = 'scoped memory for tpu_custom_call.1']
    #allocation12 [shape = 'u8[65536]{0}', space=vmem, size = 0x10000, scoped, tag = 'input window, operand 6, single buffered']
    #allocation13 [shape = 'u8[65536]{0}', space=vmem, size = 0x10000, scoped, tag = 'output window, operand 0, single buffered']
    %12 = vsyncpa [#allocation5], 0
    %13 = vsyncpa [#allocation8], 0
    %14 = vsyncpa [#allocation11], 0
    %15 = vsyncpa [#allocation6], 0
    // Predicated region
    $region2: #{tpu_custom_call.1} parent=1 // pred_check
      _
    $region3: #{tpu_custom_call.1} parent=1 // pred_check_branch
      %17 = sbr.rel (0) target = $region5
    $region4: #{tpu_custom_call.1} parent=1 // pred_region
      %s19 = ssub.s32 2048, 2048
      %20 = vsyncadd [#allocation5], %s19
      %s21 = sshll.u32 [#allocation4], 4
      %s22 = int_to_ptr.vmem [resolvable:$true] %s21
      %27 = dma.hbm_to_vmem [thread:$0]  %s0, 2048, %s22, [#allocation5], 128, 128, 8
    $region5: #{tpu_custom_call.1} parent=1 // pred_fallthru
      _
    // Predicated region
    $region6: #{tpu_custom_call.1} parent=1 // pred_check
      _
    $region7: #{tpu_custom_call.1} parent=1 // pred_check_branch
      %29 = sbr.rel (0) target = $region9
    $region8: #{tpu_custom_call.1} parent=1 // pred_region
      %s31 = ssub.s32 2048, 2048
      %32 = vsyncadd [#allocation8], %s31
      %s33 = sshll.u32 [#allocation7], 4
      %s34 = int_to_ptr.vmem [resolvable:$true] %s33
      %39 = dma.hbm_to_vmem [thread:$0]  %s1, 2048, %s34, [#allocation8], 128, 128, 8
    $region9: #{tpu_custom_call.1} parent=1 // pred_fallthru
      _
    // Predicated region
    $region10: #{tpu_custom_call.1} parent=1 // pred_check
      _
    $region11: #{tpu_custom_call.1} parent=1 // pred_check_branch
      %41 = sbr.rel (0) target = $region13
    $region12: #{tpu_custom_call.1} parent=1 // pred_region
      %s43 = ssub.s32 2048, 2048
      %44 = vsyncadd [#allocation8], %s43
      %s45 = sshll.u32 [#allocation9], 4
      %s46 = int_to_ptr.vmem [resolvable:$true] %s45
      %51 = dma.hbm_to_vmem [thread:$0]  %s2, 2048, %s46, [#allocation8], 128, 128, 8
    $region13: #{tpu_custom_call.1} parent=1 // pred_fallthru
      _
    // Predicated region
    $region14: #{tpu_custom_call.1} parent=1 // pred_check
      _
    $region15: #{tpu_custom_call.1} parent=1 // pred_check_branch
      %53 = sbr.rel (0) target = $region17
    $region16: #{tpu_custom_call.1} parent=1 // pred_region
      _
    $region17: #{tpu_custom_call.1} parent=1 // pred_fallthru
      _
    // Predicated region
    $region18: #{tpu_custom_call.1} parent=1 // pred_check
      _
    $region19: #{tpu_custom_call.1} parent=1 // pred_check_branch
      %55 = sbr.rel (0) target = $region21
    $region20: #{tpu_custom_call.1} parent=1 // pred_region
      %s57 = ssub.s32 2048, 2048
      %58 = vsyncadd [#allocation11], %s57
      %s59 = sshll.u32 [#allocation10], 4
      %s60 = int_to_ptr.vmem [resolvable:$true] %s59
      %65 = dma.hbm_to_vmem [thread:$0]  %s4, 2048, %s60, [#allocation11], 128, 128, 8
    $region21: #{tpu_custom_call.1} parent=1 // pred_fallthru
      _
    // Predicated region
    $region22: #{tpu_custom_call.1} parent=1 // pred_check
      _
    $region23: #{tpu_custom_call.1} parent=1 // pred_check_branch
      %67 = sbr.rel (0) target = $region25
    $region24: #{tpu_custom_call.1} parent=1 // pred_region
      _
    $region25: #{tpu_custom_call.1} parent=1 // pred_fallthru
      _
    // Predicated region
    $region26: #{tpu_custom_call.1} parent=1 // pred_check
      _
    $region27: #{tpu_custom_call.1} parent=1 // pred_check_branch
      %69 = sbr.rel (0) target = $region29
    $region28: #{tpu_custom_call.1} parent=1 // pred_region
      %s71 = ssub.s32 2048, 2048
      %72 = vsyncadd [#allocation11], %s71
      %s73 = sshll.u32 [#allocation12], 4
      %s74 = int_to_ptr.vmem [resolvable:$true] %s73
      %79 = dma.hbm_to_vmem [thread:$0]  %s6, 2048, %s74, [#allocation11], 128, 128, 8
    $region29: #{tpu_custom_call.1} parent=1 // pred_fallthru
      _
    // Predicated region
    $region30: #{tpu_custom_call.1} parent=1 // pred_check
      _
    $region31: #{tpu_custom_call.1} parent=1 // pred_check_branch
      %81 = sbr.rel (0) target = $region33
    $region32: #{tpu_custom_call.1} parent=1 // pred_region
      %82 = dma.done [#allocation5], 2048
    $region33: #{tpu_custom_call.1} parent=1 // pred_fallthru
      _
    // Predicated region
    $region34: #{tpu_custom_call.1} parent=1 // pred_check
      _
    $region35: #{tpu_custom_call.1} parent=1 // pred_check_branch
      %84 = sbr.rel (0) target = $region37
    $region36: #{tpu_custom_call.1} parent=1 // pred_region
      %85 = dma.done [#allocation8], 2048
    $region37: #{tpu_custom_call.1} parent=1 // pred_fallthru
      _
    // Predicated region
    $region38: #{tpu_custom_call.1} parent=1 // pred_check
      _
    $region39: #{tpu_custom_call.1} parent=1 // pred_check_branch
      %87 = sbr.rel (0) target = $region41
    $region40: #{tpu_custom_call.1} parent=1 // pred_region
      %88 = dma.done [#allocation8], 2048
    $region41: #{tpu_custom_call.1} parent=1 // pred_fallthru
      _
    // Predicated region
    $region42: #{tpu_custom_call.1} parent=1 // pred_check
      _
    $region43: #{tpu_custom_call.1} parent=1 // pred_check_branch
      %90 = sbr.rel (0) target = $region45
    $region44: #{tpu_custom_call.1} parent=1 // pred_region
      %91 = dma.done [#allocation11], 2048
    $region45: #{tpu_custom_call.1} parent=1 // pred_fallthru
      _
    // Predicated region
    $region46: #{tpu_custom_call.1} parent=1 // pred_check
      _
    $region47: #{tpu_custom_call.1} parent=1 // pred_check_branch
      %93 = sbr.rel (0) target = $region49
    $region48: #{tpu_custom_call.1} parent=1 // pred_region
      %94 = dma.done [#allocation11], 2048
    $region49: #{tpu_custom_call.1} parent=1 // pred_fallthru
      _
    %p95 = scmp.eq.s32.totalorder 0, 0
    // Predicated region
    $region50: #{tpu_custom_call.1} parent=1 // pred_check
      %p96 = pneg %p95
    $region51: #{tpu_custom_call.1} parent=1 // pred_check_branch
      %98 = sbr.rel (%p96) target = $region53
    $region52: #{tpu_custom_call.1} parent=1 // pred_region
      %v99 = vld [vmem:[#allocation4] sm:$0xff]
      %v100 = vld [vmem:[#allocation4 + $0x8] sm:$0xff]
      %v101 = vld [vmem:[#allocation4 + $0x10] sm:$0xff]
      %v102 = vld [vmem:[#allocation4 + $0x18] sm:$0xff]
      %v103 = vld [vmem:[#allocation4 + $0x20] sm:$0xff]
      %v104 = vld [vmem:[#allocation4 + $0x28] sm:$0xff]
      %v105 = vld [vmem:[#allocation4 + $0x30] sm:$0xff]
      %v106 = vld [vmem:[#allocation4 + $0x38] sm:$0xff]
      %v107 = vld [vmem:[#allocation4 + $0x40] sm:$0xff]
      %v108 = vld [vmem:[#allocation4 + $0x48] sm:$0xff]
      %v109 = vld [vmem:[#allocation4 + $0x50] sm:$0xff]
      %v110 = vld [vmem:[#allocation4 + $0x58] sm:$0xff]
      %v111 = vld [vmem:[#allocation4 + $0x60] sm:$0xff]
      %v112 = vld [vmem:[#allocation4 + $0x68] sm:$0xff]
      %v113 = vld [vmem:[#allocation4 + $0x70] sm:$0xff]
      %v114 = vld [vmem:[#allocation4 + $0x78] sm:$0xff]
      %v115 = vld [vmem:[#allocation9] sm:$0xff]
      %v116 = vld [vmem:[#allocation9 + $0x8] sm:$0xff]
      %v117 = vld [vmem:[#allocation9 + $0x10] sm:$0xff]
      %v118 = vld [vmem:[#allocation9 + $0x18] sm:$0xff]
      %v119 = vld [vmem:[#allocation9 + $0x20] sm:$0xff]
      %v120 = vld [vmem:[#allocation9 + $0x28] sm:$0xff]
      %v121 = vld [vmem:[#allocation9 + $0x30] sm:$0xff]
      %v122 = vld [vmem:[#allocation9 + $0x38] sm:$0xff]
      %v123 = vld [vmem:[#allocation9 + $0x40] sm:$0xff]
      %v124 = vld [vmem:[#allocation9 + $0x48] sm:$0xff]
      %v125 = vld [vmem:[#allocation9 + $0x50] sm:$0xff]
      %v126 = vld [vmem:[#allocation9 + $0x58] sm:$0xff]
      %v127 = vld [vmem:[#allocation9 + $0x60] sm:$0xff]
      %v128 = vld [vmem:[#allocation9 + $0x68] sm:$0xff]
      %v129 = vld [vmem:[#allocation9 + $0x70] sm:$0xff]
      %v130 = vld [vmem:[#allocation9 + $0x78] sm:$0xff]
      %v131 = vld [vmem:[%s3] sm:$0x1]
      %v133 = vlaneseq
      %v134 = vshrl.u32 %v133, 7
      %v135 = vsub.s32 0, %v134
      %v136 = vrot.slane %v131, %v135
      %138 = vmatprep.subr.mxu0 0.0
      %139 = vmatpush1.msra.mxu0 %v115
      %140 = vmatprep.subr.mxu0 0.0
      %141 = vmatpush1.msra.mxu0 %v116
      %142 = vmatprep.subr.mxu0 0.0
      %143 = vmatpush1.msra.mxu0 %v117
      %144 = vmatprep.subr.mxu0 0.0
      %145 = vmatpush1.msra.mxu0 %v118
      %146 = vmatprep.subr.mxu0 0.0
      %147 = vmatpush1.msra.mxu0 %v119
      %148 = vmatprep.subr.mxu0 0.0
      %149 = vmatpush1.msra.mxu0 %v120
      %150 = vmatprep.subr.mxu0 0.0
      %151 = vmatpush1.msra.mxu0 %v121
      %152 = vmatprep.subr.mxu0 0.0
      %153 = vmatpush1.msra.mxu0 %v122
      %154 = vmatprep.subr.mxu0 0.0
      %155 = vmatpush1.msra.mxu0 %v123
      %156 = vmatprep.subr.mxu0 0.0
      %157 = vmatpush1.msra.mxu0 %v124
      %158 = vmatprep.subr.mxu0 0.0
      %159 = vmatpush1.msra.mxu0 %v125
      %160 = vmatprep.subr.mxu0 0.0
      %161 = vmatpush1.msra.mxu0 %v126
      %162 = vmatprep.subr.mxu0 0.0
      %163 = vmatpush1.msra.mxu0 %v127
      %164 = vmatprep.subr.mxu0 0.0
      %165 = vmatpush1.msra.mxu0 %v128
      %166 = vmatprep.subr.mxu0 0.0
      %167 = vmatpush1.msra.mxu0 %v129
      %168 = vmatprep.subr.mxu0 0.0
      %169 = vmatpush1.msra.mxu0 %v130
      %170 = vmatprep.subr.mxu0 0.0
      %171 = vmatpush1.msra.mxu0 0.0
      %172 = vmatprep.subr.mxu0 0.0
      %173 = vmatpush1.msra.mxu0 0.0
      %174 = vmatprep.subr.mxu0 0.0
      %175 = vmatpush1.msra.mxu0 0.0
      %176 = vmatprep.subr.mxu0 0.0
      %177 = vmatpush1.msra.mxu0 0.0
      %178 = vmatprep.subr.mxu0 0.0
      %179 = vmatpush1.msra.mxu0 0.0
      %180 = vmatprep.subr.mxu0 0.0
      %181 = vmatpush1.msra.mxu0 0.0
      %182 = vmatprep.subr.mxu0 0.0
      %183 = vmatpush1.msra.mxu0 0.0
      %184 = vmatprep.subr.mxu0 0.0
      %185 = vmatpush1.msra.mxu0 0.0
      %186 = vmatprep.subr.mxu0 0.0
      %187 = vmatpush1.msra.mxu0 0.0
      %188 = vmatprep.subr.mxu0 0.0
      %189 = vmatpush1.msra.mxu0 0.0
      %190 = vmatprep.subr.mxu0 0.0
      %191 = vmatpush1.msra.mxu0 0.0
      %192 = vmatprep.subr.mxu0 0.0
      %193 = vmatpush1.msra.mxu0 0.0
      %194 = vmatprep.subr.mxu0 0.0
      %195 = vmatpush1.msra.mxu0 0.0
      %196 = vmatprep.subr.mxu0 0.0
      %197 = vmatpush1.msra.mxu0 0.0
      %198 = vmatprep.subr.mxu0 0.0
      %199 = vmatpush1.msra.mxu0 0.0
      %200 = vmatprep.subr.mxu0 0.0
      %201 = vmatpush1.msra.mxu0 0.0
      %202 = vmatprep.mubr.f32.mxu0 0.0
      %203 = vmatmul.mubr.f32.gmra.mrb[0].mxu0 %v99
      %v204 = vpop.f32.mrb[0].mxu0
      %v205 = vadd.f32 %v136, %v204
      %v206 = vpop.f32.mrb[0].mxu0
      %207 = vmatprep.mubr.f32.mxu0 0.0
      %208 = vmatmul.mubr.f32.gmra.mrb[0].mxu0 %v100
      %v209 = vpop.f32.mrb[0].mxu0
      %v210 = vadd.f32 %v136, %v209
      %v211 = vpop.f32.mrb[0].mxu0
      %212 = vmatprep.mubr.f32.mxu0 0.0
      %213 = vmatmul.mubr.f32.gmra.mrb[0].mxu0 %v101
      %v214 = vpop.f32.mrb[0].mxu0
      %v215 = vadd.f32 %v136, %v214
      %v216 = vpop.f32.mrb[0].mxu0
      %217 = vmatprep.mubr.f32.mxu0 0.0
      %218 = vmatmul.mubr.f32.gmra.mrb[0].mxu0 %v102
      %v219 = vpop.f32.mrb[0].mxu0
      %v220 = vadd.f32 %v136, %v219
      %v221 = vpop.f32.mrb[0].mxu0
      %222 = vmatprep.mubr.f32.mxu0 0.0
      %223 = vmatmul.mubr.f32.gmra.mrb[0].mxu0 %v103
      %v224 = vpop.f32.mrb[0].mxu0
      %v225 = vadd.f32 %v136, %v224
      %v226 = vpop.f32.mrb[0].mxu0
      %227 = vmatprep.mubr.f32.mxu0 0.0
      %228 = vmatmul.mubr.f32.gmra.mrb[0].mxu0 %v104
      %v229 = vpop.f32.mrb[0].mxu0
      %v230 = vadd.f32 %v136, %v229
      %v231 = vpop.f32.mrb[0].mxu0
      %232 = vmatprep.mubr.f32.mxu0 0.0
      %233 = vmatmul.mubr.f32.gmra.mrb[0].mxu0 %v105
      %v234 = vpop.f32.mrb[0].mxu0
      %v235 = vadd.f32 %v136, %v234
      %v236 = vpop.f32.mrb[0].mxu0
      %237 = vmatprep.mubr.f32.mxu0 0.0
      %238 = vmatmul.mubr.f32.gmra.mrb[0].mxu0 %v106
      %v239 = vpop.f32.mrb[0].mxu0
      %v240 = vadd.f32 %v136, %v239
      %v241 = vpop.f32.mrb[0].mxu0
      %242 = vmatprep.mubr.f32.mxu0 0.0
      %243 = vmatmul.mubr.f32.gmra.mrb[0].mxu0 %v107
      %v244 = vpop.f32.mrb[0].mxu0
      %v245 = vadd.f32 %v136, %v244
      %v246 = vpop.f32.mrb[0].mxu0
      %247 = vmatprep.mubr.f32.mxu0 0.0
      %248 = vmatmul.mubr.f32.gmra.mrb[0].mxu0 %v108
      %v249 = vpop.f32.mrb[0].mxu0
      %v250 = vadd.f32 %v136, %v249
      %v251 = vpop.f32.mrb[0].mxu0
      %252 = vmatprep.mubr.f32.mxu0 0.0
      %253 = vmatmul.mubr.f32.gmra.mrb[0].mxu0 %v109
      %v254 = vpop.f32.mrb[0].mxu0
      %v255 = vadd.f32 %v136, %v254
      %v256 = vpop.f32.mrb[0].mxu0
      %257 = vmatprep.mubr.f32.mxu0 0.0
      %258 = vmatmul.mubr.f32.gmra.mrb[0].mxu0 %v110
      %v259 = vpop.f32.mrb[0].mxu0
      %v260 = vadd.f32 %v136, %v259
      %v261 = vpop.f32.mrb[0].mxu0
      %262 = vmatprep.mubr.f32.mxu0 0.0
      %263 = vmatmul.mubr.f32.gmra.mrb[0].mxu0 %v111
      %v264 = vpop.f32.mrb[0].mxu0
      %v265 = vadd.f32 %v136, %v264
      %v266 = vpop.f32.mrb[0].mxu0
      %267 = vmatprep.mubr.f32.mxu0 0.0
      %268 = vmatmul.mubr.f32.gmra.mrb[0].mxu0 %v112
      %v269 = vpop.f32.mrb[0].mxu0
      %v270 = vadd.f32 %v136, %v269
      %v271 = vpop.f32.mrb[0].mxu0
      %272 = vmatprep.mubr.f32.mxu0 0.0
      %273 = vmatmul.mubr.f32.gmra.mrb[0].mxu0 %v113
      %v274 = vpop.f32.mrb[0].mxu0
      %v275 = vadd.f32 %v136, %v274
      %v276 = vpop.f32.mrb[0].mxu0
      %277 = vmatprep.mubr.f32.mxu0 0.0
      %278 = vmatmul.mubr.f32.gmra.mrb[0].mxu0 %v114
      %v279 = vpop.f32.mrb[0].mxu0
      %v280 = vadd.f32 %v136, %v279
      %v281 = vpop.f32.mrb[0].mxu0
      %282 = vdwg.mxu0
      %v283 = vmul.f32 %v205, 3.0
      %v284 = vmul.f32 %v210, 3.0
      %v285 = vmul.f32 %v215, 3.0
      %v286 = vmul.f32 %v220, 3.0
      %v287 = vmul.f32 %v225, 3.0
      %v288 = vmul.f32 %v230, 3.0
      %v289 = vmul.f32 %v235, 3.0
      %v290 = vmul.f32 %v240, 3.0
      %v291 = vmul.f32 %v245, 3.0
      %v292 = vmul.f32 %v250, 3.0
      %v293 = vmul.f32 %v255, 3.0
      %v294 = vmul.f32 %v260, 3.0
      %v295 = vmul.f32 %v265, 3.0
      %v296 = vmul.f32 %v270, 3.0
      %v297 = vmul.f32 %v275, 3.0
      %v298 = vmul.f32 %v280, 3.0
      %v299 = vtanh.pop %v283
      %v300 = vtanh.pop %v284
      %v301 = vtanh.pop %v285
      %v302 = vtanh.pop %v286
      %v303 = vtanh.pop %v287
      %v304 = vtanh.pop %v288
      %v305 = vtanh.pop %v289
      %v306 = vtanh.pop %v290
      %v307 = vtanh.pop %v291
      %v308 = vtanh.pop %v292
      %v309 = vtanh.pop %v293
      %v310 = vtanh.pop %v294
      %v311 = vtanh.pop %v295
      %v312 = vtanh.pop %v296
      %v313 = vtanh.pop %v297
      %v314 = vtanh.pop %v298
      %315 = vst [vmem:[#allocation2] sm:$0xff] %v299
      %316 = vst [vmem:[#allocation2 + $0x8] sm:$0xff] %v300
      %317 = vst [vmem:[#allocation2 + $0x10] sm:$0xff] %v301
      %318 = vst [vmem:[#allocation2 + $0x18] sm:$0xff] %v302
      %319 = vst [vmem:[#allocation2 + $0x20] sm:$0xff] %v303
      %320 = vst [vmem:[#allocation2 + $0x28] sm:$0xff] %v304
      %321 = vst [vmem:[#allocation2 + $0x30] sm:$0xff] %v305
      %322 = vst [vmem:[#allocation2 + $0x38] sm:$0xff] %v306
      %323 = vst [vmem:[#allocation2 + $0x40] sm:$0xff] %v307
      %324 = vst [vmem:[#allocation2 + $0x48] sm:$0xff] %v308
      %325 = vst [vmem:[#allocation2 + $0x50] sm:$0xff] %v309
      %326 = vst [vmem:[#allocation2 + $0x58] sm:$0xff] %v310
      %327 = vst [vmem:[#allocation2 + $0x60] sm:$0xff] %v311
      %328 = vst [vmem:[#allocation2 + $0x68] sm:$0xff] %v312
      %329 = vst [vmem:[#allocation2 + $0x70] sm:$0xff] %v313
      %330 = vst [vmem:[#allocation2 + $0x78] sm:$0xff] %v314
      %v331 = vld [vmem:[#allocation7] sm:$0xff]
      %v332 = vld [vmem:[#allocation7 + $0x8] sm:$0xff]
      %v333 = vld [vmem:[#allocation7 + $0x10] sm:$0xff]
      %v334 = vld [vmem:[#allocation7 + $0x18] sm:$0xff]
      %v335 = vld [vmem:[#allocation7 + $0x20] sm:$0xff]
      %v336 = vld [vmem:[#allocation7 + $0x28] sm:$0xff]
      %v337 = vld [vmem:[#allocation7 + $0x30] sm:$0xff]
      %v338 = vld [vmem:[#allocation7 + $0x38] sm:$0xff]
      %v339 = vld [vmem:[#allocation7 + $0x40] sm:$0xff]
      %v340 = vld [vmem:[#allocation7 + $0x48] sm:$0xff]
      %v341 = vld [vmem:[#allocation7 + $0x50] sm:$0xff]
      %v342 = vld [vmem:[#allocation7 + $0x58] sm:$0xff]
      %v343 = vld [vmem:[#allocation7 + $0x60] sm:$0xff]
      %v344 = vld [vmem:[#allocation7 + $0x68] sm:$0xff]
      %v345 = vld [vmem:[#allocation7 + $0x70] sm:$0xff]
      %v346 = vld [vmem:[#allocation7 + $0x78] sm:$0xff]
      %v347 = vld [vmem:[#allocation10] sm:$0xff]
      %v348 = vld [vmem:[#allocation10 + $0x8] sm:$0xff]
      %v349 = vld [vmem:[#allocation10 + $0x10] sm:$0xff]
      %v350 = vld [vmem:[#allocation10 + $0x18] sm:$0xff]
      %v351 = vld [vmem:[#allocation10 + $0x20] sm:$0xff]
      %v352 = vld [vmem:[#allocation10 + $0x28] sm:$0xff]
      %v353 = vld [vmem:[#allocation10 + $0x30] sm:$0xff]
      %v354 = vld [vmem:[#allocation10 + $0x38] sm:$0xff]
      %v355 = vld [vmem:[#allocation10 + $0x40] sm:$0xff]
      %v356 = vld [vmem:[#allocation10 + $0x48] sm:$0xff]
      %v357 = vld [vmem:[#allocation10 + $0x50] sm:$0xff]
      %v358 = vld [vmem:[#allocation10 + $0x58] sm:$0xff]
      %v359 = vld [vmem:[#allocation10 + $0x60] sm:$0xff]
      %v360 = vld [vmem:[#allocation10 + $0x68] sm:$0xff]
      %v361 = vld [vmem:[#allocation10 + $0x70] sm:$0xff]
      %v362 = vld [vmem:[#allocation10 + $0x78] sm:$0xff]
      %v363 = vld [vmem:[%s5] sm:$0x1]
      %v365 = vlaneseq
      %v366 = vshrl.u32 %v365, 7
      %v367 = vsub.s32 0, %v366
      %v368 = vrot.slane %v363, %v367
      %370 = vmatprep.subr.mxu0 0.0
      %371 = vmatpush1.msra.mxu0 %v347
      %372 = vmatprep.subr.mxu0 0.0
      %373 = vmatpush1.msra.mxu0 %v348
      %374 = vmatprep.subr.mxu0 0.0
      %375 = vmatpush1.msra.mxu0 %v349
      %376 = vmatprep.subr.mxu0 0.0
      %377 = vmatpush1.msra.mxu0 %v350
      %378 = vmatprep.subr.mxu0 0.0
      %379 = vmatpush1.msra.mxu0 %v351
      %380 = vmatprep.subr.mxu0 0.0
      %381 = vmatpush1.msra.mxu0 %v352
      %382 = vmatprep.subr.mxu0 0.0
      %383 = vmatpush1.msra.mxu0 %v353
      %384 = vmatprep.subr.mxu0 0.0
      %385 = vmatpush1.msra.mxu0 %v354
      %386 = vmatprep.subr.mxu0 0.0
      %387 = vmatpush1.msra.mxu0 %v355
      %388 = vmatprep.subr.mxu0 0.0
      %389 = vmatpush1.msra.mxu0 %v356
      %390 = vmatprep.subr.mxu0 0.0
      %391 = vmatpush1.msra.mxu0 %v357
      %392 = vmatprep.subr.mxu0 0.0
      %393 = vmatpush1.msra.mxu0 %v358
      %394 = vmatprep.subr.mxu0 0.0
      %395 = vmatpush1.msra.mxu0 %v359
      %396 = vmatprep.subr.mxu0 0.0
      %397 = vmatpush1.msra.mxu0 %v360
      %398 = vmatprep.subr.mxu0 0.0
      %399 = vmatpush1.msra.mxu0 %v361
      %400 = vmatprep.subr.mxu0 0.0
      %401 = vmatpush1.msra.mxu0 %v362
      %402 = vmatprep.subr.mxu0 0.0
      %403 = vmatpush1.msra.mxu0 0.0
      %404 = vmatprep.subr.mxu0 0.0
      %405 = vmatpush1.msra.mxu0 0.0
      %406 = vmatprep.subr.mxu0 0.0
      %407 = vmatpush1.msra.mxu0 0.0
      %408 = vmatprep.subr.mxu0 0.0
      %409 = vmatpush1.msra.mxu0 0.0
      %410 = vmatprep.subr.mxu0 0.0
      %411 = vmatpush1.msra.mxu0 0.0
      %412 = vmatprep.subr.mxu0 0.0
      %413 = vmatpush1.msra.mxu0 0.0
      %414 = vmatprep.subr.mxu0 0.0
      %415 = vmatpush1.msra.mxu0 0.0
      %416 = vmatprep.subr.mxu0 0.0
      %417 = vmatpush1.msra.mxu0 0.0
      %418 = vmatprep.subr.mxu0 0.0
      %419 = vmatpush1.msra.mxu0 0.0
      %420 = vmatprep.subr.mxu0 0.0
      %421 = vmatpush1.msra.mxu0 0.0
      %422 = vmatprep.subr.mxu0 0.0
      %423 = vmatpush1.msra.mxu0 0.0
      %424 = vmatprep.subr.mxu0 0.0
      %425 = vmatpush1.msra.mxu0 0.0
      %426 = vmatprep.subr.mxu0 0.0
      %427 = vmatpush1.msra.mxu0 0.0
      %428 = vmatprep.subr.mxu0 0.0
      %429 = vmatpush1.msra.mxu0 0.0
      %430 = vmatprep.subr.mxu0 0.0
      %431 = vmatpush1.msra.mxu0 0.0
      %432 = vmatprep.subr.mxu0 0.0
      %433 = vmatpush1.msra.mxu0 0.0
      %434 = vmatprep.mubr.f32.mxu0 0.0
      %435 = vmatmul.mubr.f32.gmra.mrb[0].mxu0 %v331
      %v436 = vpop.f32.mrb[0].mxu0
      %v437 = vadd.f32 %v368, %v436
      %v438 = vpop.f32.mrb[0].mxu0
      %439 = vmatprep.mubr.f32.mxu0 0.0
      %440 = vmatmul.mubr.f32.gmra.mrb[0].mxu0 %v332
      %v441 = vpop.f32.mrb[0].mxu0
      %v442 = vadd.f32 %v368, %v441
      %v443 = vpop.f32.mrb[0].mxu0
      %444 = vmatprep.mubr.f32.mxu0 0.0
      %445 = vmatmul.mubr.f32.gmra.mrb[0].mxu0 %v333
      %v446 = vpop.f32.mrb[0].mxu0
      %v447 = vadd.f32 %v368, %v446
      %v448 = vpop.f32.mrb[0].mxu0
      %449 = vmatprep.mubr.f32.mxu0 0.0
      %450 = vmatmul.mubr.f32.gmra.mrb[0].mxu0 %v334
      %v451 = vpop.f32.mrb[0].mxu0
      %v452 = vadd.f32 %v368, %v451
      %v453 = vpop.f32.mrb[0].mxu0
      %454 = vmatprep.mubr.f32.mxu0 0.0
      %455 = vmatmul.mubr.f32.gmra.mrb[0].mxu0 %v335
      %v456 = vpop.f32.mrb[0].mxu0
      %v457 = vadd.f32 %v368, %v456
      %v458 = vpop.f32.mrb[0].mxu0
      %459 = vmatprep.mubr.f32.mxu0 0.0
      %460 = vmatmul.mubr.f32.gmra.mrb[0].mxu0 %v336
      %v461 = vpop.f32.mrb[0].mxu0
      %v462 = vadd.f32 %v368, %v461
      %v463 = vpop.f32.mrb[0].mxu0
      %464 = vmatprep.mubr.f32.mxu0 0.0
      %465 = vmatmul.mubr.f32.gmra.mrb[0].mxu0 %v337
      %v466 = vpop.f32.mrb[0].mxu0
      %v467 = vadd.f32 %v368, %v466
      %v468 = vpop.f32.mrb[0].mxu0
      %469 = vmatprep.mubr.f32.mxu0 0.0
      %470 = vmatmul.mubr.f32.gmra.mrb[0].mxu0 %v338
      %v471 = vpop.f32.mrb[0].mxu0
      %v472 = vadd.f32 %v368, %v471
      %v473 = vpop.f32.mrb[0].mxu0
      %474 = vmatprep.mubr.f32.mxu0 0.0
      %475 = vmatmul.mubr.f32.gmra.mrb[0].mxu0 %v339
      %v476 = vpop.f32.mrb[0].mxu0
      %v477 = vadd.f32 %v368, %v476
      %v478 = vpop.f32.mrb[0].mxu0
      %479 = vmatprep.mubr.f32.mxu0 0.0
      %480 = vmatmul.mubr.f32.gmra.mrb[0].mxu0 %v340
      %v481 = vpop.f32.mrb[0].mxu0
      %v482 = vadd.f32 %v368, %v481
      %v483 = vpop.f32.mrb[0].mxu0
      %484 = vmatprep.mubr.f32.mxu0 0.0
      %485 = vmatmul.mubr.f32.gmra.mrb[0].mxu0 %v341
      %v486 = vpop.f32.mrb[0].mxu0
      %v487 = vadd.f32 %v368, %v486
      %v488 = vpop.f32.mrb[0].mxu0
      %489 = vmatprep.mubr.f32.mxu0 0.0
      %490 = vmatmul.mubr.f32.gmra.mrb[0].mxu0 %v342
      %v491 = vpop.f32.mrb[0].mxu0
      %v492 = vadd.f32 %v368, %v491
      %v493 = vpop.f32.mrb[0].mxu0
      %494 = vmatprep.mubr.f32.mxu0 0.0
      %495 = vmatmul.mubr.f32.gmra.mrb[0].mxu0 %v343
      %v496 = vpop.f32.mrb[0].mxu0
      %v497 = vadd.f32 %v368, %v496
      %v498 = vpop.f32.mrb[0].mxu0
      %499 = vmatprep.mubr.f32.mxu0 0.0
      %500 = vmatmul.mubr.f32.gmra.mrb[0].mxu0 %v344
      %v501 = vpop.f32.mrb[0].mxu0
      %v502 = vadd.f32 %v368, %v501
      %v503 = vpop.f32.mrb[0].mxu0
      %504 = vmatprep.mubr.f32.mxu0 0.0
      %505 = vmatmul.mubr.f32.gmra.mrb[0].mxu0 %v345
      %v506 = vpop.f32.mrb[0].mxu0
      %v507 = vadd.f32 %v368, %v506
      %v508 = vpop.f32.mrb[0].mxu0
      %509 = vmatprep.mubr.f32.mxu0 0.0
      %510 = vmatmul.mubr.f32.gmra.mrb[0].mxu0 %v346
      %v511 = vpop.f32.mrb[0].mxu0
      %v512 = vadd.f32 %v368, %v511
      %v513 = vpop.f32.mrb[0].mxu0
      %514 = vdwg.mxu0
      %v515 = vmul.f32 %v437, 3.0
      %v516 = vmul.f32 %v442, 3.0
      %v517 = vmul.f32 %v447, 3.0
      %v518 = vmul.f32 %v452, 3.0
      %v519 = vmul.f32 %v457, 3.0
      %v520 = vmul.f32 %v462, 3.0
      %v521 = vmul.f32 %v467, 3.0
      %v522 = vmul.f32 %v472, 3.0
      %v523 = vmul.f32 %v477, 3.0
      %v524 = vmul.f32 %v482, 3.0
      %v525 = vmul.f32 %v487, 3.0
      %v526 = vmul.f32 %v492, 3.0
      %v527 = vmul.f32 %v497, 3.0
      %v528 = vmul.f32 %v502, 3.0
      %v529 = vmul.f32 %v507, 3.0
      %v530 = vmul.f32 %v512, 3.0
      %v531 = vtanh.pop %v515
      %v532 = vtanh.pop %v516
      %v533 = vtanh.pop %v517
      %v534 = vtanh.pop %v518
      %v535 = vtanh.pop %v519
      %v536 = vtanh.pop %v520
      %v537 = vtanh.pop %v521
      %v538 = vtanh.pop %v522
      %v539 = vtanh.pop %v523
      %v540 = vtanh.pop %v524
      %v541 = vtanh.pop %v525
      %v542 = vtanh.pop %v526
      %v543 = vtanh.pop %v527
      %v544 = vtanh.pop %v528
      %v545 = vtanh.pop %v529
      %v546 = vtanh.pop %v530
      %547 = vst [vmem:[#allocation3] sm:$0xff] %v531
      %548 = vst [vmem:[#allocation3 + $0x8] sm:$0xff] %v532
      %549 = vst [vmem:[#allocation3 + $0x10] sm:$0xff] %v533
      %550 = vst [vmem:[#allocation3 + $0x18] sm:$0xff] %v534
      %551 = vst [vmem:[#allocation3 + $0x20] sm:$0xff] %v535
      %552 = vst [vmem:[#allocation3 + $0x28] sm:$0xff] %v536
      %553 = vst [vmem:[#allocation3 + $0x30] sm:$0xff] %v537
      %554 = vst [vmem:[#allocation3 + $0x38] sm:$0xff] %v538
      %555 = vst [vmem:[#allocation3 + $0x40] sm:$0xff] %v539
      %556 = vst [vmem:[#allocation3 + $0x48] sm:$0xff] %v540
      %557 = vst [vmem:[#allocation3 + $0x50] sm:$0xff] %v541
      %558 = vst [vmem:[#allocation3 + $0x58] sm:$0xff] %v542
      %559 = vst [vmem:[#allocation3 + $0x60] sm:$0xff] %v543
      %560 = vst [vmem:[#allocation3 + $0x68] sm:$0xff] %v544
      %561 = vst [vmem:[#allocation3 + $0x70] sm:$0xff] %v545
      %562 = vst [vmem:[#allocation3 + $0x78] sm:$0xff] %v546
    $region53: #{tpu_custom_call.1} parent=1 // pred_fallthru
      _
    %v563 = vld [vmem:[#allocation2] sm:$0xff]
    %v564 = vld [vmem:[#allocation2 + $0x8] sm:$0xff]
    %v565 = vld [vmem:[#allocation2 + $0x10] sm:$0xff]
    %v566 = vld [vmem:[#allocation2 + $0x18] sm:$0xff]
    %v567 = vld [vmem:[#allocation2 + $0x20] sm:$0xff]
    %v568 = vld [vmem:[#allocation2 + $0x28] sm:$0xff]
    %v569 = vld [vmem:[#allocation2 + $0x30] sm:$0xff]
    %v570 = vld [vmem:[#allocation2 + $0x38] sm:$0xff]
    %v571 = vld [vmem:[#allocation2 + $0x40] sm:$0xff]
    %v572 = vld [vmem:[#allocation2 + $0x48] sm:$0xff]
    %v573 = vld [vmem:[#allocation2 + $0x50] sm:$0xff]
    %v574 = vld [vmem:[#allocation2 + $0x58] sm:$0xff]
    %v575 = vld [vmem:[#allocation2 + $0x60] sm:$0xff]
    %v576 = vld [vmem:[#allocation2 + $0x68] sm:$0xff]
    %v577 = vld [vmem:[#allocation2 + $0x70] sm:$0xff]
    %v578 = vld [vmem:[#allocation2 + $0x78] sm:$0xff]
    %v579 = vld [vmem:[#allocation3] sm:$0xff]
    %v580 = vld [vmem:[#allocation3 + $0x8] sm:$0xff]
    %v581 = vld [vmem:[#allocation3 + $0x10] sm:$0xff]
    %v582 = vld [vmem:[#allocation3 + $0x18] sm:$0xff]
    %v583 = vld [vmem:[#allocation3 + $0x20] sm:$0xff]
    %v584 = vld [vmem:[#allocation3 + $0x28] sm:$0xff]
    %v585 = vld [vmem:[#allocation3 + $0x30] sm:$0xff]
    %v586 = vld [vmem:[#allocation3 + $0x38] sm:$0xff]
    %v587 = vld [vmem:[#allocation3 + $0x40] sm:$0xff]
    %v588 = vld [vmem:[#allocation3 + $0x48] sm:$0xff]
    %v589 = vld [vmem:[#allocation3 + $0x50] sm:$0xff]
    %v590 = vld [vmem:[#allocation3 + $0x58] sm:$0xff]
    %v591 = vld [vmem:[#allocation3 + $0x60] sm:$0xff]
    %v592 = vld [vmem:[#allocation3 + $0x68] sm:$0xff]
    %v593 = vld [vmem:[#allocation3 + $0x70] sm:$0xff]
    %v594 = vld [vmem:[#allocation3 + $0x78] sm:$0xff]
    %s595 = smul.u32 0, 128
    %s596 = scalar_lea.vmem [#allocation2], %s595
    %v597 = vld [vmem:[%s596] sm:$0xff]
    %v598 = vld [vmem:[%s596 + $0x8] sm:$0xff]
    %v599 = vld [vmem:[%s596 + $0x10] sm:$0xff]
    %v600 = vld [vmem:[%s596 + $0x18] sm:$0xff]
    %v601 = vld [vmem:[%s596 + $0x20] sm:$0xff]
    %v602 = vld [vmem:[%s596 + $0x28] sm:$0xff]
    %v603 = vld [vmem:[%s596 + $0x30] sm:$0xff]
    %v604 = vld [vmem:[%s596 + $0x38] sm:$0xff]
    %v605 = vld [vmem:[%s596 + $0x40] sm:$0xff]
    %v606 = vld [vmem:[%s596 + $0x48] sm:$0xff]
    %v607 = vld [vmem:[%s596 + $0x50] sm:$0xff]
    %v608 = vld [vmem:[%s596 + $0x58] sm:$0xff]
    %v609 = vld [vmem:[%s596 + $0x60] sm:$0xff]
    %v610 = vld [vmem:[%s596 + $0x68] sm:$0xff]
    %v611 = vld [vmem:[%s596 + $0x70] sm:$0xff]
    %v612 = vld [vmem:[%s596 + $0x78] sm:$0xff]
    %s613 = scalar_lea.vmem [#allocation3], %s595
    %v614 = vld [vmem:[%s613] sm:$0xff]
    %v615 = vld [vmem:[%s613 + $0x8] sm:$0xff]
    %v616 = vld [vmem:[%s613 + $0x10] sm:$0xff]
    %v617 = vld [vmem:[%s613 + $0x18] sm:$0xff]
    %v618 = vld [vmem:[%s613 + $0x20] sm:$0xff]
    %v619 = vld [vmem:[%s613 + $0x28] sm:$0xff]
    %v620 = vld [vmem:[%s613 + $0x30] sm:$0xff]
    %v621 = vld [vmem:[%s613 + $0x38] sm:$0xff]
    %v622 = vld [vmem:[%s613 + $0x40] sm:$0xff]
    %v623 = vld [vmem:[%s613 + $0x48] sm:$0xff]
    %v624 = vld [vmem:[%s613 + $0x50] sm:$0xff]
    %v625 = vld [vmem:[%s613 + $0x58] sm:$0xff]
    %v626 = vld [vmem:[%s613 + $0x60] sm:$0xff]
    %v627 = vld [vmem:[%s613 + $0x68] sm:$0xff]
    %v628 = vld [vmem:[%s613 + $0x70] sm:$0xff]
    %v629 = vld [vmem:[%s613 + $0x78] sm:$0xff]
    %630 = vmatprep.subr.mxu0 0.0
    %631 = vmatpush1.xpose.msra.mxu0 %v579
    %632 = vmatprep.subr.mxu0 0.0
    %633 = vmatpush1.xpose.msra.mxu0 %v580
    %634 = vmatprep.subr.mxu0 0.0
    %635 = vmatpush1.xpose.msra.mxu0 %v581
    %636 = vmatprep.subr.mxu0 0.0
    %637 = vmatpush1.xpose.msra.mxu0 %v582
    %638 = vmatprep.subr.mxu0 0.0
    %639 = vmatpush1.xpose.msra.mxu0 %v583
    %640 = vmatprep.subr.mxu0 0.0
    %641 = vmatpush1.xpose.msra.mxu0 %v584
    %642 = vmatprep.subr.mxu0 0.0
    %643 = vmatpush1.xpose.msra.mxu0 %v585
    %644 = vmatprep.subr.mxu0 0.0
    %645 = vmatpush1.xpose.msra.mxu0 %v586
    %646 = vmatprep.subr.mxu0 0.0
    %647 = vmatpush1.xpose.msra.mxu0 %v587
    %648 = vmatprep.subr.mxu0 0.0
    %649 = vmatpush1.xpose.msra.mxu0 %v588
    %650 = vmatprep.subr.mxu0 0.0
    %651 = vmatpush1.xpose.msra.mxu0 %v589
    %652 = vmatprep.subr.mxu0 0.0
    %653 = vmatpush1.xpose.msra.mxu0 %v590
    %654 = vmatprep.subr.mxu0 0.0
    %655 = vmatpush1.xpose.msra.mxu0 %v591
    %656 = vmatprep.subr.mxu0 0.0
    %657 = vmatpush1.xpose.msra.mxu0 %v592
    %658 = vmatprep.subr.mxu0 0.0
    %659 = vmatpush1.xpose.msra.mxu0 %v593
    %660 = vmatprep.subr.mxu0 0.0
    %661 = vmatpush1.xpose.msra.mxu0 %v594
    %662 = vmatprep.subr.mxu0 0.0
    %663 = vmatpush1.xpose.msra.mxu0 0.0
    %664 = vmatprep.subr.mxu0 0.0
    %665 = vmatpush1.xpose.msra.mxu0 0.0
    %666 = vmatprep.subr.mxu0 0.0
    %667 = vmatpush1.xpose.msra.mxu0 0.0
    %668 = vmatprep.subr.mxu0 0.0
    %669 = vmatpush1.xpose.msra.mxu0 0.0
    %670 = vmatprep.subr.mxu0 0.0
    %671 = vmatpush1.xpose.msra.mxu0 0.0
    %672 = vmatprep.subr.mxu0 0.0
    %673 = vmatpush1.xpose.msra.mxu0 0.0
    %674 = vmatprep.subr.mxu0 0.0
    %675 = vmatpush1.xpose.msra.mxu0 0.0
    %676 = vmatprep.subr.mxu0 0.0
    %677 = vmatpush1.xpose.msra.mxu0 0.0
    %678 = vmatprep.subr.mxu0 0.0
    %679 = vmatpush1.xpose.msra.mxu0 0.0
    %680 = vmatprep.subr.mxu0 0.0
    %681 = vmatpush1.xpose.msra.mxu0 0.0
    %682 = vmatprep.subr.mxu0 0.0
    %683 = vmatpush1.xpose.msra.mxu0 0.0
    %684 = vmatprep.subr.mxu0 0.0
    %685 = vmatpush1.xpose.msra.mxu0 0.0
    %686 = vmatprep.subr.mxu0 0.0
    %687 = vmatpush1.xpose.msra.mxu0 0.0
    %688 = vmatprep.subr.mxu0 0.0
    %689 = vmatpush1.xpose.msra.mxu0 0.0
    %690 = vmatprep.subr.mxu0 0.0
    %691 = vmatpush1.xpose.msra.mxu0 0.0
    %692 = vmatprep.subr.mxu0 0.0
    %693 = vmatpush1.xpose.msra.mxu0 0.0
    %694 = vmatprep.mubr.f32.mxu0 0.0
    %695 = vmatmul.mubr.f32.gmra.mrb[0].mxu0 %v597
    %v696 = vpop.f32.mrb[0].mxu0
    %v697 = vadd.f32 0.0, %v696
    %v698 = vpop.f32.mrb[0].mxu0
    %699 = vmatprep.mubr.f32.mxu0 0.0
    %700 = vmatmul.mubr.f32.gmra.mrb[0].mxu0 %v598
    %v701 = vpop.f32.mrb[0].mxu0
    %v702 = vadd.f32 0.0, %v701
    %v703 = vpop.f32.mrb[0].mxu0
    %704 = vmatprep.mubr.f32.mxu0 0.0
    %705 = vmatmul.mubr.f32.gmra.mrb[0].mxu0 %v599
    %v706 = vpop.f32.mrb[0].mxu0
    %v707 = vadd.f32 0.0, %v706
    %v708 = vpop.f32.mrb[0].mxu0
    %709 = vmatprep.mubr.f32.mxu0 0.0
    %710 = vmatmul.mubr.f32.gmra.mrb[0].mxu0 %v600
    %v711 = vpop.f32.mrb[0].mxu0
    %v712 = vadd.f32 0.0, %v711
    %v713 = vpop.f32.mrb[0].mxu0
    %714 = vmatprep.mubr.f32.mxu0 0.0
    %715 = vmatmul.mubr.f32.gmra.mrb[0].mxu0 %v601
    %v716 = vpop.f32.mrb[0].mxu0
    %v717 = vadd.f32 0.0, %v716
    %v718 = vpop.f32.mrb[0].mxu0
    %719 = vmatprep.mubr.f32.mxu0 0.0
    %720 = vmatmul.mubr.f32.gmra.mrb[0].mxu0 %v602
    %v721 = vpop.f32.mrb[0].mxu0
    %v722 = vadd.f32 0.0, %v721
    %v723 = vpop.f32.mrb[0].mxu0
    %724 = vmatprep.mubr.f32.mxu0 0.0
    %725 = vmatmul.mubr.f32.gmra.mrb[0].mxu0 %v603
    %v726 = vpop.f32.mrb[0].mxu0
    %v727 = vadd.f32 0.0, %v726
    %v728 = vpop.f32.mrb[0].mxu0
    %729 = vmatprep.mubr.f32.mxu0 0.0
    %730 = vmatmul.mubr.f32.gmra.mrb[0].mxu0 %v604
    %v731 = vpop.f32.mrb[0].mxu0
    %v732 = vadd.f32 0.0, %v731
    %v733 = vpop.f32.mrb[0].mxu0
    %734 = vmatprep.mubr.f32.mxu0 0.0
    %735 = vmatmul.mubr.f32.gmra.mrb[0].mxu0 %v605
    %v736 = vpop.f32.mrb[0].mxu0
    %v737 = vadd.f32 0.0, %v736
    %v738 = vpop.f32.mrb[0].mxu0
    %739 = vmatprep.mubr.f32.mxu0 0.0
    %740 = vmatmul.mubr.f32.gmra.mrb[0].mxu0 %v606
    %v741 = vpop.f32.mrb[0].mxu0
    %v742 = vadd.f32 0.0, %v741
    %v743 = vpop.f32.mrb[0].mxu0
    %744 = vmatprep.mubr.f32.mxu0 0.0
    %745 = vmatmul.mubr.f32.gmra.mrb[0].mxu0 %v607
    %v746 = vpop.f32.mrb[0].mxu0
    %v747 = vadd.f32 0.0, %v746
    %v748 = vpop.f32.mrb[0].mxu0
    %749 = vmatprep.mubr.f32.mxu0 0.0
    %750 = vmatmul.mubr.f32.gmra.mrb[0].mxu0 %v608
    %v751 = vpop.f32.mrb[0].mxu0
    %v752 = vadd.f32 0.0, %v751
    %v753 = vpop.f32.mrb[0].mxu0
    %754 = vmatprep.mubr.f32.mxu0 0.0
    %755 = vmatmul.mubr.f32.gmra.mrb[0].mxu0 %v609
    %v756 = vpop.f32.mrb[0].mxu0
    %v757 = vadd.f32 0.0, %v756
    %v758 = vpop.f32.mrb[0].mxu0
    %759 = vmatprep.mubr.f32.mxu0 0.0
    %760 = vmatmul.mubr.f32.gmra.mrb[0].mxu0 %v610
    %v761 = vpop.f32.mrb[0].mxu0
    %v762 = vadd.f32 0.0, %v761
    %v763 = vpop.f32.mrb[0].mxu0
    %764 = vmatprep.mubr.f32.mxu0 0.0
    %765 = vmatmul.mubr.f32.gmra.mrb[0].mxu0 %v611
    %v766 = vpop.f32.mrb[0].mxu0
    %v767 = vadd.f32 0.0, %v766
    %v768 = vpop.f32.mrb[0].mxu0
    %769 = vmatprep.mubr.f32.mxu0 0.0
    %770 = vmatmul.mubr.f32.gmra.mrb[0].mxu0 %v612
    %v771 = vpop.f32.mrb[0].mxu0
    %v772 = vadd.f32 0.0, %v771
    %v773 = vpop.f32.mrb[0].mxu0
    %774 = vdwg.mxu0
    %775 = vmatprep.subr.mxu0 0.0
    %776 = vmatpush1.xpose.msra.mxu0 %v563
    %777 = vmatprep.subr.mxu0 0.0
    %778 = vmatpush1.xpose.msra.mxu0 %v564
    %779 = vmatprep.subr.mxu0 0.0
    %780 = vmatpush1.xpose.msra.mxu0 %v565
    %781 = vmatprep.subr.mxu0 0.0
    %782 = vmatpush1.xpose.msra.mxu0 %v566
    %783 = vmatprep.subr.mxu0 0.0
    %784 = vmatpush1.xpose.msra.mxu0 %v567
    %785 = vmatprep.subr.mxu0 0.0
    %786 = vmatpush1.xpose.msra.mxu0 %v568
    %787 = vmatprep.subr.mxu0 0.0
    %788 = vmatpush1.xpose.msra.mxu0 %v569
    %789 = vmatprep.subr.mxu0 0.0
    %790 = vmatpush1.xpose.msra.mxu0 %v570
    %791 = vmatprep.subr.mxu0 0.0
    %792 = vmatpush1.xpose.msra.mxu0 %v571
    %793 = vmatprep.subr.mxu0 0.0
    %794 = vmatpush1.xpose.msra.mxu0 %v572
    %795 = vmatprep.subr.mxu0 0.0
    %796 = vmatpush1.xpose.msra.mxu0 %v573
    %797 = vmatprep.subr.mxu0 0.0
    %798 = vmatpush1.xpose.msra.mxu0 %v574
    %799 = vmatprep.subr.mxu0 0.0
    %800 = vmatpush1.xpose.msra.mxu0 %v575
    %801 = vmatprep.subr.mxu0 0.0
    %802 = vmatpush1.xpose.msra.mxu0 %v576
    %803 = vmatprep.subr.mxu0 0.0
    %804 = vmatpush1.xpose.msra.mxu0 %v577
    %805 = vmatprep.subr.mxu0 0.0
    %806 = vmatpush1.xpose.msra.mxu0 %v578
    %807 = vmatprep.subr.mxu0 0.0
    %808 = vmatpush1.xpose.msra.mxu0 0.0
    %809 = vmatprep.subr.mxu0 0.0
    %810 = vmatpush1.xpose.msra.mxu0 0.0
    %811 = vmatprep.subr.mxu0 0.0
    %812 = vmatpush1.xpose.msra.mxu0 0.0
    %813 = vmatprep.subr.mxu0 0.0
    %814 = vmatpush1.xpose.msra.mxu0 0.0
    %815 = vmatprep.subr.mxu0 0.0
    %816 = vmatpush1.xpose.msra.mxu0 0.0
    %817 = vmatprep.subr.mxu0 0.0
    %818 = vmatpush1.xpose.msra.mxu0 0.0
    %819 = vmatprep.subr.mxu0 0.0
    %820 = vmatpush1.xpose.msra.mxu0 0.0
    %821 = vmatprep.subr.mxu0 0.0
    %822 = vmatpush1.xpose.msra.mxu0 0.0
    %823 = vmatprep.subr.mxu0 0.0
    %824 = vmatpush1.xpose.msra.mxu0 0.0
    %825 = vmatprep.subr.mxu0 0.0
    %826 = vmatpush1.xpose.msra.mxu0 0.0
    %827 = vmatprep.subr.mxu0 0.0
    %828 = vmatpush1.xpose.msra.mxu0 0.0
    %829 = vmatprep.subr.mxu0 0.0
    %830 = vmatpush1.xpose.msra.mxu0 0.0
    %831 = vmatprep.subr.mxu0 0.0
    %832 = vmatpush1.xpose.msra.mxu0 0.0
    %833 = vmatprep.subr.mxu0 0.0
    %834 = vmatpush1.xpose.msra.mxu0 0.0
    %835 = vmatprep.subr.mxu0 0.0
    %836 = vmatpush1.xpose.msra.mxu0 0.0
    %837 = vmatprep.subr.mxu0 0.0
    %838 = vmatpush1.xpose.msra.mxu0 0.0
    %839 = vmatprep.mubr.f32.mxu0 0.0
    %840 = vmatmul.mubr.f32.gmra.mrb[0].mxu0 %v614
    %v841 = vpop.f32.mrb[0].mxu0
    %v842 = vadd.f32 0.0, %v841
    %v843 = vpop.f32.mrb[0].mxu0
    %844 = vmatprep.mubr.f32.mxu0 0.0
    %845 = vmatmul.mubr.f32.gmra.mrb[0].mxu0 %v615
    %v846 = vpop.f32.mrb[0].mxu0
    %v847 = vadd.f32 0.0, %v846
    %v848 = vpop.f32.mrb[0].mxu0
    %849 = vmatprep.mubr.f32.mxu0 0.0
    %850 = vmatmul.mubr.f32.gmra.mrb[0].mxu0 %v616
    %v851 = vpop.f32.mrb[0].mxu0
    %v852 = vadd.f32 0.0, %v851
    %v853 = vpop.f32.mrb[0].mxu0
    %854 = vmatprep.mubr.f32.mxu0 0.0
    %855 = vmatmul.mubr.f32.gmra.mrb[0].mxu0 %v617
    %v856 = vpop.f32.mrb[0].mxu0
    %v857 = vadd.f32 0.0, %v856
    %v858 = vpop.f32.mrb[0].mxu0
    %859 = vmatprep.mubr.f32.mxu0 0.0
    %860 = vmatmul.mubr.f32.gmra.mrb[0].mxu0 %v618
    %v861 = vpop.f32.mrb[0].mxu0
    %v862 = vadd.f32 0.0, %v861
    %v863 = vpop.f32.mrb[0].mxu0
    %864 = vmatprep.mubr.f32.mxu0 0.0
    %865 = vmatmul.mubr.f32.gmra.mrb[0].mxu0 %v619
    %v866 = vpop.f32.mrb[0].mxu0
    %v867 = vadd.f32 0.0, %v866
    %v868 = vpop.f32.mrb[0].mxu0
    %869 = vmatprep.mubr.f32.mxu0 0.0
    %870 = vmatmul.mubr.f32.gmra.mrb[0].mxu0 %v620
    %v871 = vpop.f32.mrb[0].mxu0
    %v872 = vadd.f32 0.0, %v871
    %v873 = vpop.f32.mrb[0].mxu0
    %874 = vmatprep.mubr.f32.mxu0 0.0
    %875 = vmatmul.mubr.f32.gmra.mrb[0].mxu0 %v621
    %v876 = vpop.f32.mrb[0].mxu0
    %v877 = vadd.f32 0.0, %v876
    %v878 = vpop.f32.mrb[0].mxu0
    %879 = vmatprep.mubr.f32.mxu0 0.0
    %880 = vmatmul.mubr.f32.gmra.mrb[0].mxu0 %v622
    %v881 = vpop.f32.mrb[0].mxu0
    %v882 = vadd.f32 0.0, %v881
    %v883 = vpop.f32.mrb[0].mxu0
    %884 = vmatprep.mubr.f32.mxu0 0.0
    %885 = vmatmul.mubr.f32.gmra.mrb[0].mxu0 %v623
    %v886 = vpop.f32.mrb[0].mxu0
    %v887 = vadd.f32 0.0, %v886
    %v888 = vpop.f32.mrb[0].mxu0
    %889 = vmatprep.mubr.f32.mxu0 0.0
    %890 = vmatmul.mubr.f32.gmra.mrb[0].mxu0 %v624
    %v891 = vpop.f32.mrb[0].mxu0
    %v892 = vadd.f32 0.0, %v891
    %v893 = vpop.f32.mrb[0].mxu0
    %894 = vmatprep.mubr.f32.mxu0 0.0
    %895 = vmatmul.mubr.f32.gmra.mrb[0].mxu0 %v625
    %v896 = vpop.f32.mrb[0].mxu0
    %v897 = vadd.f32 0.0, %v896
    %v898 = vpop.f32.mrb[0].mxu0
    %899 = vmatprep.mubr.f32.mxu0 0.0
    %900 = vmatmul.mubr.f32.gmra.mrb[0].mxu0 %v626
    %v901 = vpop.f32.mrb[0].mxu0
    %v902 = vadd.f32 0.0, %v901
    %v903 = vpop.f32.mrb[0].mxu0
    %904 = vmatprep.mubr.f32.mxu0 0.0
    %905 = vmatmul.mubr.f32.gmra.mrb[0].mxu0 %v627
    %v906 = vpop.f32.mrb[0].mxu0
    %v907 = vadd.f32 0.0, %v906
    %v908 = vpop.f32.mrb[0].mxu0
    %909 = vmatprep.mubr.f32.mxu0 0.0
    %910 = vmatmul.mubr.f32.gmra.mrb[0].mxu0 %v628
    %v911 = vpop.f32.mrb[0].mxu0
    %v912 = vadd.f32 0.0, %v911
    %v913 = vpop.f32.mrb[0].mxu0
    %914 = vmatprep.mubr.f32.mxu0 0.0
    %915 = vmatmul.mubr.f32.gmra.mrb[0].mxu0 %v629
    %v916 = vpop.f32.mrb[0].mxu0
    %v917 = vadd.f32 0.0, %v916
    %v918 = vpop.f32.mrb[0].mxu0
    %919 = vdwg.mxu0
    %v920 = vsub.f32 %v697, %v842
    %v921 = vsub.f32 %v702, %v847
    %v922 = vsub.f32 %v707, %v852
    %v923 = vsub.f32 %v712, %v857
    %v924 = vsub.f32 %v717, %v862
    %v925 = vsub.f32 %v722, %v867
    %v926 = vsub.f32 %v727, %v872
    %v927 = vsub.f32 %v732, %v877
    %v928 = vsub.f32 %v737, %v882
    %v929 = vsub.f32 %v742, %v887
    %v930 = vsub.f32 %v747, %v892
    %v931 = vsub.f32 %v752, %v897
    %v932 = vsub.f32 %v757, %v902
    %v933 = vsub.f32 %v762, %v907
    %v934 = vsub.f32 %v767, %v912
    %v935 = vsub.f32 %v772, %v917
    %v936 = vmul.f32 %v920, 3.0
    %v937 = vmul.f32 %v921, 3.0
    %v938 = vmul.f32 %v922, 3.0
    %v939 = vmul.f32 %v923, 3.0
    %v940 = vmul.f32 %v924, 3.0
    %v941 = vmul.f32 %v925, 3.0
    %v942 = vmul.f32 %v926, 3.0
    %v943 = vmul.f32 %v927, 3.0
    %v944 = vmul.f32 %v928, 3.0
    %v945 = vmul.f32 %v929, 3.0
    %v946 = vmul.f32 %v930, 3.0
    %v947 = vmul.f32 %v931, 3.0
    %v948 = vmul.f32 %v932, 3.0
    %v949 = vmul.f32 %v933, 3.0
    %v950 = vmul.f32 %v934, 3.0
    %v951 = vmul.f32 %v935, 3.0
    %v952 = vtanh.pop %v936
    %v953 = vtanh.pop %v937
    %v954 = vtanh.pop %v938
    %v955 = vtanh.pop %v939
    %v956 = vtanh.pop %v940
    %v957 = vtanh.pop %v941
    %v958 = vtanh.pop %v942
    %v959 = vtanh.pop %v943
    %v960 = vtanh.pop %v944
    %v961 = vtanh.pop %v945
    %v962 = vtanh.pop %v946
    %v963 = vtanh.pop %v947
    %v964 = vtanh.pop %v948
    %v965 = vtanh.pop %v949
    %v966 = vtanh.pop %v950
    %v967 = vtanh.pop %v951
    %v968 = vmax.f32 %v952, 0.0
    %v969 = vmax.f32 %v953, 0.0
    %v970 = vmax.f32 %v954, 0.0
    %v971 = vmax.f32 %v955, 0.0
    %v972 = vmax.f32 %v956, 0.0
    %v973 = vmax.f32 %v957, 0.0
    %v974 = vmax.f32 %v958, 0.0
    %v975 = vmax.f32 %v959, 0.0
    %v976 = vmax.f32 %v960, 0.0
    %v977 = vmax.f32 %v961, 0.0
    %v978 = vmax.f32 %v962, 0.0
    %v979 = vmax.f32 %v963, 0.0
    %v980 = vmax.f32 %v964, 0.0
    %v981 = vmax.f32 %v965, 0.0
    %v982 = vmax.f32 %v966, 0.0
    %v983 = vmax.f32 %v967, 0.0
    %v984 = vlaneseq
    %v985 = vand.u32 %v984, 127
    %vm986 = vcmp.lt.s32.totalorder %v985, 16
    %v987 = vld [vmem:[#allocation12] sm:$0xff]
    %v988 = vld [vmem:[#allocation12 + $0x8] sm:$0xff]
    %v989 = vld [vmem:[#allocation12 + $0x10] sm:$0xff]
    %v990 = vld [vmem:[#allocation12 + $0x18] sm:$0xff]
    %v991 = vld [vmem:[#allocation12 + $0x20] sm:$0xff]
    %v992 = vld [vmem:[#allocation12 + $0x28] sm:$0xff]
    %v993 = vld [vmem:[#allocation12 + $0x30] sm:$0xff]
    %v994 = vld [vmem:[#allocation12 + $0x38] sm:$0xff]
    %v995 = vld [vmem:[#allocation12 + $0x40] sm:$0xff]
    %v996 = vld [vmem:[#allocation12 + $0x48] sm:$0xff]
    %v997 = vld [vmem:[#allocation12 + $0x50] sm:$0xff]
    %v998 = vld [vmem:[#allocation12 + $0x58] sm:$0xff]
    %v999 = vld [vmem:[#allocation12 + $0x60] sm:$0xff]
    %v1000 = vld [vmem:[#allocation12 + $0x68] sm:$0xff]
    %v1001 = vld [vmem:[#allocation12 + $0x70] sm:$0xff]
    %v1002 = vld [vmem:[#allocation12 + $0x78] sm:$0xff]
    %v1003 = vadd.f32 %v968, %v987
    %v1004 = vadd.f32 %v969, %v988
    %v1005 = vadd.f32 %v970, %v989
    %v1006 = vadd.f32 %v971, %v990
    %v1007 = vadd.f32 %v972, %v991
    %v1008 = vadd.f32 %v973, %v992
    %v1009 = vadd.f32 %v974, %v993
    %v1010 = vadd.f32 %v975, %v994
    %v1011 = vadd.f32 %v976, %v995
    %v1012 = vadd.f32 %v977, %v996
    %v1013 = vadd.f32 %v978, %v997
    %v1014 = vadd.f32 %v979, %v998
    %v1015 = vadd.f32 %v980, %v999
    %v1016 = vadd.f32 %v981, %v1000
    %v1017 = vadd.f32 %v982, %v1001
    %v1018 = vadd.f32 %v983, %v1002
    %v1019 = vsel %vm986, %v1003, -1e+30
    %v1020 = vsel %vm986, %v1004, -1e+30
    %v1021 = vsel %vm986, %v1005, -1e+30
    %v1022 = vsel %vm986, %v1006, -1e+30
    %v1023 = vsel %vm986, %v1007, -1e+30
    %v1024 = vsel %vm986, %v1008, -1e+30
    %v1025 = vsel %vm986, %v1009, -1e+30
    %v1026 = vsel %vm986, %v1010, -1e+30
    %v1027 = vsel %vm986, %v1011, -1e+30
    %v1028 = vsel %vm986, %v1012, -1e+30
    %v1029 = vsel %vm986, %v1013, -1e+30
    %v1030 = vsel %vm986, %v1014, -1e+30
    %v1031 = vsel %vm986, %v1015, -1e+30
    %v1032 = vsel %vm986, %v1016, -1e+30
    %v1033 = vsel %vm986, %v1017, -1e+30
    %v1034 = vsel %vm986, %v1018, -1e+30
    %1035 = vmax.xlane.f32.xlu0 %v1019
    %v1036 = vpop.xlane.xlu0 %1035
    %1037 = vmax.xlane.f32.xlu0 %v1020
    %v1038 = vpop.xlane.xlu0 %1037
    %1039 = vmax.xlane.f32.xlu0 %v1021
    %v1040 = vpop.xlane.xlu0 %1039
    %1041 = vmax.xlane.f32.xlu0 %v1022
    %v1042 = vpop.xlane.xlu0 %1041
    %1043 = vmax.xlane.f32.xlu0 %v1023
    %v1044 = vpop.xlane.xlu0 %1043
    %1045 = vmax.xlane.f32.xlu0 %v1024
    %v1046 = vpop.xlane.xlu0 %1045
    %1047 = vmax.xlane.f32.xlu0 %v1025
    %v1048 = vpop.xlane.xlu0 %1047
    %1049 = vmax.xlane.f32.xlu0 %v1026
    %v1050 = vpop.xlane.xlu0 %1049
    %1051 = vmax.xlane.f32.xlu0 %v1027
    %v1052 = vpop.xlane.xlu0 %1051
    %1053 = vmax.xlane.f32.xlu0 %v1028
    %v1054 = vpop.xlane.xlu0 %1053
    %1055 = vmax.xlane.f32.xlu0 %v1029
    %v1056 = vpop.xlane.xlu0 %1055
    %1057 = vmax.xlane.f32.xlu0 %v1030
    %v1058 = vpop.xlane.xlu0 %1057
    %1059 = vmax.xlane.f32.xlu0 %v1031
    %v1060 = vpop.xlane.xlu0 %1059
    %1061 = vmax.xlane.f32.xlu0 %v1032
    %v1062 = vpop.xlane.xlu0 %1061
    %1063 = vmax.xlane.f32.xlu0 %v1033
    %v1064 = vpop.xlane.xlu0 %1063
    %1065 = vmax.xlane.f32.xlu0 %v1034
    %v1066 = vpop.xlane.xlu0 %1065
    %vm1067 = vcmp.ge.f32.partialorder %v1019, %v1036
    %vm1068 = vcmp.ge.f32.partialorder %v1020, %v1038
    %vm1069 = vcmp.ge.f32.partialorder %v1021, %v1040
    %vm1070 = vcmp.ge.f32.partialorder %v1022, %v1042
    %vm1071 = vcmp.ge.f32.partialorder %v1023, %v1044
    %vm1072 = vcmp.ge.f32.partialorder %v1024, %v1046
    %vm1073 = vcmp.ge.f32.partialorder %v1025, %v1048
    %vm1074 = vcmp.ge.f32.partialorder %v1026, %v1050
    %vm1075 = vcmp.ge.f32.partialorder %v1027, %v1052
    %vm1076 = vcmp.ge.f32.partialorder %v1028, %v1054
    %vm1077 = vcmp.ge.f32.partialorder %v1029, %v1056
    %vm1078 = vcmp.ge.f32.partialorder %v1030, %v1058
    %vm1079 = vcmp.ge.f32.partialorder %v1031, %v1060
    %vm1080 = vcmp.ge.f32.partialorder %v1032, %v1062
    %vm1081 = vcmp.ge.f32.partialorder %v1033, %v1064
    %vm1082 = vcmp.ge.f32.partialorder %v1034, %v1066
    %v1083 = vsel %vm1067, -1e+30, %v1019
    %v1084 = vsel %vm1068, -1e+30, %v1020
    %v1085 = vsel %vm1069, -1e+30, %v1021
    %v1086 = vsel %vm1070, -1e+30, %v1022
    %v1087 = vsel %vm1071, -1e+30, %v1023
    %v1088 = vsel %vm1072, -1e+30, %v1024
    %v1089 = vsel %vm1073, -1e+30, %v1025
    %v1090 = vsel %vm1074, -1e+30, %v1026
    %v1091 = vsel %vm1075, -1e+30, %v1027
    %v1092 = vsel %vm1076, -1e+30, %v1028
    %v1093 = vsel %vm1077, -1e+30, %v1029
    %v1094 = vsel %vm1078, -1e+30, %v1030
    %v1095 = vsel %vm1079, -1e+30, %v1031
    %v1096 = vsel %vm1080, -1e+30, %v1032
    %v1097 = vsel %vm1081, -1e+30, %v1033
    %v1098 = vsel %vm1082, -1e+30, %v1034
    %1099 = vmax.xlane.f32.xlu0 %v1083
    %v1100 = vpop.xlane.xlu0 %1099
    %1101 = vmax.xlane.f32.xlu0 %v1084
    %v1102 = vpop.xlane.xlu0 %1101
    %1103 = vmax.xlane.f32.xlu0 %v1085
    %v1104 = vpop.xlane.xlu0 %1103
    %1105 = vmax.xlane.f32.xlu0 %v1086
    %v1106 = vpop.xlane.xlu0 %1105
    %1107 = vmax.xlane.f32.xlu0 %v1087
    %v1108 = vpop.xlane.xlu0 %1107
    %1109 = vmax.xlane.f32.xlu0 %v1088
    %v1110 = vpop.xlane.xlu0 %1109
    %1111 = vmax.xlane.f32.xlu0 %v1089
    %v1112 = vpop.xlane.xlu0 %1111
    %1113 = vmax.xlane.f32.xlu0 %v1090
    %v1114 = vpop.xlane.xlu0 %1113
    %1115 = vmax.xlane.f32.xlu0 %v1091
    %v1116 = vpop.xlane.xlu0 %1115
    %1117 = vmax.xlane.f32.xlu0 %v1092
    %v1118 = vpop.xlane.xlu0 %1117
    %1119 = vmax.xlane.f32.xlu0 %v1093
    %v1120 = vpop.xlane.xlu0 %1119
    %1121 = vmax.xlane.f32.xlu0 %v1094
    %v1122 = vpop.xlane.xlu0 %1121
    %1123 = vmax.xlane.f32.xlu0 %v1095
    %v1124 = vpop.xlane.xlu0 %1123
    %1125 = vmax.xlane.f32.xlu0 %v1096
    %v1126 = vpop.xlane.xlu0 %1125
    %1127 = vmax.xlane.f32.xlu0 %v1097
    %v1128 = vpop.xlane.xlu0 %1127
    %1129 = vmax.xlane.f32.xlu0 %v1098
    %v1130 = vpop.xlane.xlu0 %1129
    %vm1131 = vcmp.ge.f32.partialorder %v1083, %v1100
    %vm1132 = vcmp.ge.f32.partialorder %v1084, %v1102
    %vm1133 = vcmp.ge.f32.partialorder %v1085, %v1104
    %vm1134 = vcmp.ge.f32.partialorder %v1086, %v1106
    %vm1135 = vcmp.ge.f32.partialorder %v1087, %v1108
    %vm1136 = vcmp.ge.f32.partialorder %v1088, %v1110
    %vm1137 = vcmp.ge.f32.partialorder %v1089, %v1112
    %vm1138 = vcmp.ge.f32.partialorder %v1090, %v1114
    %vm1139 = vcmp.ge.f32.partialorder %v1091, %v1116
    %vm1140 = vcmp.ge.f32.partialorder %v1092, %v1118
    %vm1141 = vcmp.ge.f32.partialorder %v1093, %v1120
    %vm1142 = vcmp.ge.f32.partialorder %v1094, %v1122
    %vm1143 = vcmp.ge.f32.partialorder %v1095, %v1124
    %vm1144 = vcmp.ge.f32.partialorder %v1096, %v1126
    %vm1145 = vcmp.ge.f32.partialorder %v1097, %v1128
    %vm1146 = vcmp.ge.f32.partialorder %v1098, %v1130
    %v1147 = vsel %vm1131, -1e+30, %v1083
    %v1148 = vsel %vm1132, -1e+30, %v1084
    %v1149 = vsel %vm1133, -1e+30, %v1085
    %v1150 = vsel %vm1134, -1e+30, %v1086
    %v1151 = vsel %vm1135, -1e+30, %v1087
    %v1152 = vsel %vm1136, -1e+30, %v1088
    %v1153 = vsel %vm1137, -1e+30, %v1089
    %v1154 = vsel %vm1138, -1e+30, %v1090
    %v1155 = vsel %vm1139, -1e+30, %v1091
    %v1156 = vsel %vm1140, -1e+30, %v1092
    %v1157 = vsel %vm1141, -1e+30, %v1093
    %v1158 = vsel %vm1142, -1e+30, %v1094
    %v1159 = vsel %vm1143, -1e+30, %v1095
    %v1160 = vsel %vm1144, -1e+30, %v1096
    %v1161 = vsel %vm1145, -1e+30, %v1097
    %v1162 = vsel %vm1146, -1e+30, %v1098
    %1163 = vmax.xlane.f32.xlu0 %v1147
    %v1164 = vpop.xlane.xlu0 %1163
    %1165 = vmax.xlane.f32.xlu0 %v1148
    %v1166 = vpop.xlane.xlu0 %1165
    %1167 = vmax.xlane.f32.xlu0 %v1149
    %v1168 = vpop.xlane.xlu0 %1167
    %1169 = vmax.xlane.f32.xlu0 %v1150
    %v1170 = vpop.xlane.xlu0 %1169
    %1171 = vmax.xlane.f32.xlu0 %v1151
    %v1172 = vpop.xlane.xlu0 %1171
    %1173 = vmax.xlane.f32.xlu0 %v1152
    %v1174 = vpop.xlane.xlu0 %1173
    %1175 = vmax.xlane.f32.xlu0 %v1153
    %v1176 = vpop.xlane.xlu0 %1175
    %1177 = vmax.xlane.f32.xlu0 %v1154
    %v1178 = vpop.xlane.xlu0 %1177
    %1179 = vmax.xlane.f32.xlu0 %v1155
    %v1180 = vpop.xlane.xlu0 %1179
    %1181 = vmax.xlane.f32.xlu0 %v1156
    %v1182 = vpop.xlane.xlu0 %1181
    %1183 = vmax.xlane.f32.xlu0 %v1157
    %v1184 = vpop.xlane.xlu0 %1183
    %1185 = vmax.xlane.f32.xlu0 %v1158
    %v1186 = vpop.xlane.xlu0 %1185
    %1187 = vmax.xlane.f32.xlu0 %v1159
    %v1188 = vpop.xlane.xlu0 %1187
    %1189 = vmax.xlane.f32.xlu0 %v1160
    %v1190 = vpop.xlane.xlu0 %1189
    %1191 = vmax.xlane.f32.xlu0 %v1161
    %v1192 = vpop.xlane.xlu0 %1191
    %1193 = vmax.xlane.f32.xlu0 %v1162
    %v1194 = vpop.xlane.xlu0 %1193
    %vm1195 = vcmp.ge.f32.partialorder %v1147, %v1164
    %vm1196 = vcmp.ge.f32.partialorder %v1148, %v1166
    %vm1197 = vcmp.ge.f32.partialorder %v1149, %v1168
    %vm1198 = vcmp.ge.f32.partialorder %v1150, %v1170
    %vm1199 = vcmp.ge.f32.partialorder %v1151, %v1172
    %vm1200 = vcmp.ge.f32.partialorder %v1152, %v1174
    %vm1201 = vcmp.ge.f32.partialorder %v1153, %v1176
    %vm1202 = vcmp.ge.f32.partialorder %v1154, %v1178
    %vm1203 = vcmp.ge.f32.partialorder %v1155, %v1180
    %vm1204 = vcmp.ge.f32.partialorder %v1156, %v1182
    %vm1205 = vcmp.ge.f32.partialorder %v1157, %v1184
    %vm1206 = vcmp.ge.f32.partialorder %v1158, %v1186
    %vm1207 = vcmp.ge.f32.partialorder %v1159, %v1188
    %vm1208 = vcmp.ge.f32.partialorder %v1160, %v1190
    %vm1209 = vcmp.ge.f32.partialorder %v1161, %v1192
    %vm1210 = vcmp.ge.f32.partialorder %v1162, %v1194
    %v1211 = vsel %vm1195, -1e+30, %v1147
    %v1212 = vsel %vm1196, -1e+30, %v1148
    %v1213 = vsel %vm1197, -1e+30, %v1149
    %v1214 = vsel %vm1198, -1e+30, %v1150
    %v1215 = vsel %vm1199, -1e+30, %v1151
    %v1216 = vsel %vm1200, -1e+30, %v1152
    %v1217 = vsel %vm1201, -1e+30, %v1153
    %v1218 = vsel %vm1202, -1e+30, %v1154
    %v1219 = vsel %vm1203, -1e+30, %v1155
    %v1220 = vsel %vm1204, -1e+30, %v1156
    %v1221 = vsel %vm1205, -1e+30, %v1157
    %v1222 = vsel %vm1206, -1e+30, %v1158
    %v1223 = vsel %vm1207, -1e+30, %v1159
    %v1224 = vsel %vm1208, -1e+30, %v1160
    %v1225 = vsel %vm1209, -1e+30, %v1161
    %v1226 = vsel %vm1210, -1e+30, %v1162
    %1227 = vmax.xlane.f32.xlu0 %v1211
    %v1228 = vpop.xlane.xlu0 %1227
    %1229 = vmax.xlane.f32.xlu0 %v1212
    %v1230 = vpop.xlane.xlu0 %1229
    %1231 = vmax.xlane.f32.xlu0 %v1213
    %v1232 = vpop.xlane.xlu0 %1231
    %1233 = vmax.xlane.f32.xlu0 %v1214
    %v1234 = vpop.xlane.xlu0 %1233
    %1235 = vmax.xlane.f32.xlu0 %v1215
    %v1236 = vpop.xlane.xlu0 %1235
    %1237 = vmax.xlane.f32.xlu0 %v1216
    %v1238 = vpop.xlane.xlu0 %1237
    %1239 = vmax.xlane.f32.xlu0 %v1217
    %v1240 = vpop.xlane.xlu0 %1239
    %1241 = vmax.xlane.f32.xlu0 %v1218
    %v1242 = vpop.xlane.xlu0 %1241
    %1243 = vmax.xlane.f32.xlu0 %v1219
    %v1244 = vpop.xlane.xlu0 %1243
    %1245 = vmax.xlane.f32.xlu0 %v1220
    %v1246 = vpop.xlane.xlu0 %1245
    %1247 = vmax.xlane.f32.xlu0 %v1221
    %v1248 = vpop.xlane.xlu0 %1247
    %1249 = vmax.xlane.f32.xlu0 %v1222
    %v1250 = vpop.xlane.xlu0 %1249
    %1251 = vmax.xlane.f32.xlu0 %v1223
    %v1252 = vpop.xlane.xlu0 %1251
    %1253 = vmax.xlane.f32.xlu0 %v1224
    %v1254 = vpop.xlane.xlu0 %1253
    %1255 = vmax.xlane.f32.xlu0 %v1225
    %v1256 = vpop.xlane.xlu0 %1255
    %1257 = vmax.xlane.f32.xlu0 %v1226
    %v1258 = vpop.xlane.xlu0 %1257
    %vm1259 = vcmp.ge.f32.partialorder %v1019, %v1228
    %vm1260 = vcmp.ge.f32.partialorder %v1020, %v1230
    %vm1261 = vcmp.ge.f32.partialorder %v1021, %v1232
    %vm1262 = vcmp.ge.f32.partialorder %v1022, %v1234
    %vm1263 = vcmp.ge.f32.partialorder %v1023, %v1236
    %vm1264 = vcmp.ge.f32.partialorder %v1024, %v1238
    %vm1265 = vcmp.ge.f32.partialorder %v1025, %v1240
    %vm1266 = vcmp.ge.f32.partialorder %v1026, %v1242
    %vm1267 = vcmp.ge.f32.partialorder %v1027, %v1244
    %vm1268 = vcmp.ge.f32.partialorder %v1028, %v1246
    %vm1269 = vcmp.ge.f32.partialorder %v1029, %v1248
    %vm1270 = vcmp.ge.f32.partialorder %v1030, %v1250
    %vm1271 = vcmp.ge.f32.partialorder %v1031, %v1252
    %vm1272 = vcmp.ge.f32.partialorder %v1032, %v1254
    %vm1273 = vcmp.ge.f32.partialorder %v1033, %v1256
    %vm1274 = vcmp.ge.f32.partialorder %v1034, %v1258
    %vm1275 = vmand %vm1259, %vm986
    %vm1276 = vmand %vm1260, %vm986
    %vm1277 = vmand %vm1261, %vm986
    %vm1278 = vmand %vm1262, %vm986
    %vm1279 = vmand %vm1263, %vm986
    %vm1280 = vmand %vm1264, %vm986
    %vm1281 = vmand %vm1265, %vm986
    %vm1282 = vmand %vm1266, %vm986
    %vm1283 = vmand %vm1267, %vm986
    %vm1284 = vmand %vm1268, %vm986
    %vm1285 = vmand %vm1269, %vm986
    %vm1286 = vmand %vm1270, %vm986
    %vm1287 = vmand %vm1271, %vm986
    %vm1288 = vmand %vm1272, %vm986
    %vm1289 = vmand %vm1273, %vm986
    %vm1290 = vmand %vm1274, %vm986
    %v1291 = vsel %vm1275, %v968, 0.0
    %v1292 = vsel %vm1276, %v969, 0.0
    %v1293 = vsel %vm1277, %v970, 0.0
    %v1294 = vsel %vm1278, %v971, 0.0
    %v1295 = vsel %vm1279, %v972, 0.0
    %v1296 = vsel %vm1280, %v973, 0.0
    %v1297 = vsel %vm1281, %v974, 0.0
    %v1298 = vsel %vm1282, %v975, 0.0
    %v1299 = vsel %vm1283, %v976, 0.0
    %v1300 = vsel %vm1284, %v977, 0.0
    %v1301 = vsel %vm1285, %v978, 0.0
    %v1302 = vsel %vm1286, %v979, 0.0
    %v1303 = vsel %vm1287, %v980, 0.0
    %v1304 = vsel %vm1288, %v981, 0.0
    %v1305 = vsel %vm1289, %v982, 0.0
    %v1306 = vsel %vm1290, %v983, 0.0
    %1307 = vst [vmem:[#allocation13] sm:$0xff] %v1291
    %1308 = vst [vmem:[#allocation13 + $0x8] sm:$0xff] %v1292
    %1309 = vst [vmem:[#allocation13 + $0x10] sm:$0xff] %v1293
    %1310 = vst [vmem:[#allocation13 + $0x18] sm:$0xff] %v1294
    %1311 = vst [vmem:[#allocation13 + $0x20] sm:$0xff] %v1295
    %1312 = vst [vmem:[#allocation13 + $0x28] sm:$0xff] %v1296
    %1313 = vst [vmem:[#allocation13 + $0x30] sm:$0xff] %v1297
    %1314 = vst [vmem:[#allocation13 + $0x38] sm:$0xff] %v1298
    %1315 = vst [vmem:[#allocation13 + $0x40] sm:$0xff] %v1299
    %1316 = vst [vmem:[#allocation13 + $0x48] sm:$0xff] %v1300
    %1317 = vst [vmem:[#allocation13 + $0x50] sm:$0xff] %v1301
    %1318 = vst [vmem:[#allocation13 + $0x58] sm:$0xff] %v1302
    %1319 = vst [vmem:[#allocation13 + $0x60] sm:$0xff] %v1303
    %1320 = vst [vmem:[#allocation13 + $0x68] sm:$0xff] %v1304
    %1321 = vst [vmem:[#allocation13 + $0x70] sm:$0xff] %v1305
    %1322 = vst [vmem:[#allocation13 + $0x78] sm:$0xff] %v1306
    // Predicated region
    $region54: #{tpu_custom_call.1} parent=1 // pred_check
      _
    $region55: #{tpu_custom_call.1} parent=1 // pred_check_branch
      %1324 = sbr.rel (0) target = $region57
    $region56: #{tpu_custom_call.1} parent=1 // pred_region
      %s1326 = ssub.s32 2048, 2048
      %1327 = vsyncadd [#allocation6], %s1326
      %s1328 = sshll.u32 [#allocation13], 4
      %s1329 = int_to_ptr.vmem [resolvable:$true] %s1328
      %1334 = dma.vmem_to_hbm [thread:$0]  %s1329, 2048, %s7, [#allocation6], 128, 128, 8
    $region57: #{tpu_custom_call.1} parent=1 // pred_fallthru
      _
    // Predicated region
    $region58: #{tpu_custom_call.1} parent=1 // pred_check
      _
    $region59: #{tpu_custom_call.1} parent=1 // pred_check_branch
      %1336 = sbr.rel (0) target = $region61
    $region60: #{tpu_custom_call.1} parent=1 // pred_region
      %1337 = dma.done [#allocation6], 2048
    $region61: #{tpu_custom_call.1} parent=1 // pred_fallthru
      _
    %1338 = vsyncpa [#allocation5], 1
    %1339 = vsyncpa [#allocation8], 1
    %1340 = vsyncpa [#allocation11], 1
    %1341 = vsyncpa [#allocation6], 1

</llo_original>
